<compile_context>
chip_gen: v7x
topology: tpu7x:2x2x1
jax: 0.10.0
libtpu: 0.0.40
codegen_flags: <defaults>
</compile_context>

<pallas_src>
import functools

import jax
import jax.numpy as jnp
from jax.experimental import pallas as pl
from jax.experimental.pallas import tpu as pltpu


def _round_up(x, m):
    return (x + m - 1) // m * m


def _tpu_arch():
    """Best-effort TPU-generation probe.

    Returns (tensorcores_per_chip, bf16_vector_math_ok). Anything unrecognized falls back to the
    conservative (1 TC, f32 gate math) pair — always correct, just not peak-tuned.
    """
    cores, bf16_ok = 1, False
    try:
        kind = jax.devices()[0].device_kind.lower()
        if "v7" in kind or "7x" in kind:
            cores, bf16_ok = 2, True       # v7x: 2 TensorCores, bf16 VPU/EUP
        elif "v6" in kind:
            cores, bf16_ok = 1, True       # v6e: 1 TC, bf16 VPU/EUP
        # v5e (and unknown): 1 TC, no bf16 VPU/EUP -> keep defaults
    except Exception:
        pass
    return cores, bf16_ok


def _choose_row_tile(S, num_tensorcores, max_tile=1024):
    """Rows per grid step.

    Single-TC chips (v5e/v6e): the grid is a sequential loop on one core, each extra step costs
    ~0.35 us of pipeline overhead, so use one full-extent block unless S is very large.
    2-TC chips (v7x): "parallel" shards grid steps across TensorCores, so use an even step count
    (>=4 when S is large) with multiple-of-16 row tiles so both cores get balanced work.
    """
    if S <= 32 or (num_tensorcores <= 1 and S <= max_tile):
        return S, 1
    if num_tensorcores <= 1:
        nsteps = pl.cdiv(S, max_tile)
    else:
        nsteps = 4 if S >= 4 * 128 else 2
        while pl.cdiv(S, nsteps) > max_tile:
            nsteps += 2
    ts = min(_round_up(pl.cdiv(S, nsteps), 16), S)
    return ts, pl.cdiv(S, ts)


def bilstm_gather_kernel(ids_ref, g_ref, b_ref, o_ref, *, compute_dtype):
    """Fused embedding-gather + seq_len==1 BiLSTM cell for one tile of tokens.

    ids_ref: (ts, 2)      int32  [word_id, vocab_words + tag_id]
    g_ref:   (Vc, 6*Hp)   bf16   folded tables: rows [E_word @ W_word ; E_tag @ W_tag];
                                 columns [Wi_f|Wg_f|Wo_f|Wi_b|Wg_b|Wo_b]  (forget gate dropped: c0 == 0)
    b_ref:   (1, 6*Hp)    f32    (b_ih + b_hh) in the same column layout (pad lanes are 0)
    o_ref:   (ts, 2*Hp)   f32    [h_fwd | h_bwd]   (Hp = hidden rounded up to a 128-lane multiple)
    """
    ts = ids_ref.shape[0]
    vc = g_ref.shape[0]
    hp = o_ref.shape[-1] // 2

    ids = ids_ref[...]
    col = jax.lax.broadcasted_iota(jnp.int32, (ts, vc), 1)
    # word ids live in rows [0, Vw) and shifted tag ids in rows [Vw, Vw+Vt), so one OR-ed one-hot
    # row selects both; the MXU dot then performs gather(word) + gather(tag) in a single pass.
    onehot = ((col == ids[:, 0:1]) | (col == ids[:, 1:2])).astype(g_ref.dtype)

    for d in range(2):                              # 0: forward direction, 1: backward direction
        gsl = slice(3 * hp * d, 3 * hp * (d + 1))   # lane-aligned (3*Hp is a multiple of 128)
        g = jnp.dot(onehot, g_ref[:, gsl], preferred_element_type=jnp.float32)
        g = (g + b_ref[:, gsl]).astype(compute_dtype)   # bf16 gate math on v6e/v7x, f32 on v5e
        i_g = jax.nn.sigmoid(g[:, 0 * hp:1 * hp])
        g_g = jnp.tanh(g[:, 1 * hp:2 * hp])
        o_g = jax.nn.sigmoid(g[:, 2 * hp:3 * hp])
        h = o_g * jnp.tanh(i_g * g_g)               # h0 = c0 = 0  =>  c = sigmoid(i)*tanh(g)
        o_ref[:, hp * d:hp * (d + 1)] = h.astype(o_ref.dtype)


def fixed_window_lstm_forward(sentence, tags, params, *, strip_padding=False, max_rows_per_step=1024):
    """Returns the stacked BiLSTM outputs.

    strip_padding=False (default, fastest): (S, 2*Hp) float32 with layout
        [h_fwd (H) | zeros (Hp-H) | h_bwd (H) | zeros (Hp-H)]   (pad lanes are exactly 0).
    strip_padding=True: module-exact (S, 2*H) = [h_fwd | h_bwd]  (identical to the default when Hp == H).
    """
    g_cat = params["g_cat"]                      # (Vc, 6*Hp) bf16 folded gather tables
    b_cat = params["b_cat"]                      # (1, 6*Hp)  f32
    H = params["hidden_dim"]
    vw = params["vocab_words"]
    Hp = b_cat.shape[1] // 6
    Vc = g_cat.shape[0]
    S = sentence.shape[0]

    # Tiny (S, 2) int32 side input — the only per-token HBM read besides the output.
    ids = jnp.stack([sentence.astype(jnp.int32), tags.astype(jnp.int32) + vw], axis=1)

    num_cores, bf16_gates = _tpu_arch()
    compute_dtype = jnp.bfloat16 if bf16_gates else jnp.float32
    ts, nsteps = _choose_row_tile(S, num_cores, max_rows_per_step)

    cost = pl.CostEstimate(
        flops=2 * S * Vc * 6 * Hp,
        transcendentals=8 * S * Hp,
        bytes_accessed=S * 2 * 4 + Vc * 6 * Hp * 2 + 6 * Hp * 4 + S * 2 * Hp * 4,
    )

    # Explicit VMEM budget (matters on v7x's 64 MiB physical VMEM if ts / Hp ever grow).
    vmem_bytes = (2 * ts * 2 * 4              # ids block, double-buffered
                  + Vc * 6 * Hp * 2           # resident gather table (bf16)
                  + 6 * Hp * 4                # resident bias
                  + 2 * ts * 2 * Hp * 4       # output block, double-buffered
                  + ts * 6 * Hp * 4)          # live gates intermediate (f32 upper bound)
    vmem_limit = int(min(max(2 * vmem_bytes, 32 << 20), 64 << 20))

    out = pl.pallas_call(
        functools.partial(bilstm_gather_kernel, compute_dtype=compute_dtype),
        out_shape=jax.ShapeDtypeStruct((S, 2 * Hp), jnp.float32),
        grid=(nsteps,),
        in_specs=[
            pl.BlockSpec((ts, 2), lambda i: (i, 0)),
            pl.BlockSpec((Vc, 6 * Hp), lambda i: (0, 0)),   # constant block index -> fetched once, resident
            pl.BlockSpec((1, 6 * Hp), lambda i: (0, 0)),
        ],
        out_specs=pl.BlockSpec((ts, 2 * Hp), lambda i: (i, 0)),
        compiler_params=pltpu.CompilerParams(
            dimension_semantics=("parallel",),
            vmem_limit_bytes=vmem_limit),
        cost_estimate=cost,
    )(ids, g_cat, b_cat)

    if not strip_padding or Hp == H:
        return out
    # Module-exact (S, 2*H) view: only needed by consumers that cannot read the padded layout.
    return jnp.concatenate([out[:, :H], out[:, Hp:Hp + H]], axis=-1)


def init_params(key, vocab_words, vocab_tags, word_dim, tag_dim, hidden_dim, *, lane=128):
    D = word_dim + tag_dim
    H = hidden_dim
    Hp = _round_up(H, lane)
    ks = jax.random.split(key, 8)

    # Embedding.weight.data.normal_(0.0, 0.01)
    emb_word = 0.01 * jax.random.normal(ks[0], (vocab_words, word_dim), jnp.float32)
    emb_tag = 0.01 * jax.random.normal(ks[1], (vocab_tags, tag_dim), jnp.float32)

    # nn.LSTM default init: uniform(-1/sqrt(H), 1/sqrt(H)).
    bound = 1.0 / jnp.sqrt(jnp.float32(H))
    u = lambda k, shape: jax.random.uniform(k, shape, jnp.float32, -bound, bound)
    w_ih_f = u(ks[2], (4 * H, D))
    w_ih_b = u(ks[3], (4 * H, D))
    b_ih_f, b_hh_f = u(ks[4], (4 * H,)), u(ks[5], (4 * H,))
    b_ih_b, b_hh_b = u(ks[6], (4 * H,)), u(ks[7], (4 * H,))

    def pack_dir(w_ih, b_sum):
        # PyTorch gate order i,f,g,o. Drop f (it multiplies c0 == 0); pad each kept gate to Hp lanes.
        w_cols, b_cols = [], []
        for g in (0, 2, 3):                                        # i, g, o
            wg = w_ih[g * H:(g + 1) * H, :].T                      # (D, H)
            bg = b_sum[g * H:(g + 1) * H]                          # (H,)
            w_cols.append(jnp.pad(wg, ((0, 0), (0, Hp - H))))
            b_cols.append(jnp.pad(bg, (0, Hp - H)))
        return jnp.concatenate(w_cols, axis=1), jnp.concatenate(b_cols)

    wf, bf = pack_dir(w_ih_f, b_ih_f + b_hh_f)
    wb, bb = pack_dir(w_ih_b, b_ih_b + b_hh_b)
    w_cat = jnp.concatenate([wf, wb], axis=1)                      # (D, 6*Hp) f32
    b_cat = jnp.concatenate([bf, bb])[None, :].astype(jnp.float32)  # (1, 6*Hp)

    # Fold the tiny embedding tables into the input projection (E @ W precompute):
    #   gates[i] = G[sentence[i]] + G[vocab_words + tags[i]] + b
    hi = jax.lax.Precision.HIGHEST
    g_word = jnp.dot(emb_word, w_cat[:word_dim, :], precision=hi)   # (Vw, 6*Hp) f32
    g_tag = jnp.dot(emb_tag, w_cat[word_dim:, :], precision=hi)     # (Vt, 6*Hp) f32
    g_cat = jnp.concatenate([g_word, g_tag], axis=0).astype(jnp.bfloat16)   # (Vw+Vt, 6*Hp)

    return {
        # raw f32 parameters (reference path, independent of the kernel packing)
        "emb_word": emb_word, "emb_tag": emb_tag,
        "w_ih_f": w_ih_f, "w_ih_b": w_ih_b,
        "b_f": b_ih_f + b_hh_f, "b_b": b_ih_b + b_hh_b,
        # kernel-side folded / packed parameters
        "g_cat": g_cat, "b_cat": b_cat,
        "hidden_dim": H, "vocab_words": vocab_words,
    }


def reference_forward(sentence, tags, params):
    """Pure-JAX mirror of the exact PyTorch module semantics (f32, unpacked weights) -> (S, 2*H)."""
    H = params["hidden_dim"]
    hi = jax.lax.Precision.HIGHEST
    x = jnp.concatenate([params["emb_word"][sentence], params["emb_tag"][tags]], axis=-1)

    def direction(w_ih, b):
        g = jnp.dot(x, w_ih.T, precision=hi) + b[None, :]            # (S, 4H), gate order i,f,g,o
        i = jax.nn.sigmoid(g[:, :H])
        gg = jnp.tanh(g[:, 2 * H:3 * H])
        o = jax.nn.sigmoid(g[:, 3 * H:4 * H])
        return o * jnp.tanh(i * gg)                                  # c0 == 0 -> f-gate drops out

    return jnp.concatenate([direction(params["w_ih_f"], params["b_f"]),
                            direction(params["w_ih_b"], params["b_b"])], axis=-1)


def reference_forward_packed(sentence, tags, params, *, compute_dtype=jnp.float32):
    """Mirror of the kernel's data path (bf16 folded tables, same gate-math dtype) -> padded (S, 2*Hp)."""
    g = params["g_cat"].astype(jnp.float32)
    b = params["b_cat"][0]
    Hp = b.shape[0] // 6
    vw = params["vocab_words"]
    gates = (g[sentence] + g[tags + vw] + b).astype(compute_dtype)

    def cell(x):
        i = jax.nn.sigmoid(x[:, 0 * Hp:1 * Hp])
        gg = jnp.tanh(x[:, 1 * Hp:2 * Hp])
        o = jax.nn.sigmoid(x[:, 2 * Hp:3 * Hp])
        return (o * jnp.tanh(i * gg)).astype(jnp.float32)

    return jnp.concatenate([cell(gates[:, :3 * Hp]), cell(gates[:, 3 * Hp:])], axis=-1)


def _check(sentence, tags, params):
    S = sentence.shape[0]
    H = params["hidden_dim"]
    Hp = params["b_cat"].shape[1] // 6
    _, bf16_gates = _tpu_arch()
    cd = jnp.bfloat16 if bf16_gates else jnp.float32

    # Default (padded-layout) output.
    out = jax.block_until_ready(fixed_window_lstm_forward(sentence, tags, params))
    assert out.shape == (S, 2 * Hp), out.shape

    # Pad lanes (when Hp > H) must be exactly zero so downstream padded-layout consumers are safe.
    if Hp != H:
        pad = jnp.concatenate([out[:, H:Hp], out[:, Hp + H:]], axis=-1)
        assert float(jnp.max(jnp.abs(pad))) == 0.0

    # Tight check: identical folded-table data path + same gate-math dtype.
    ref_packed = jax.block_until_ready(
        reference_forward_packed(sentence, tags, params, compute_dtype=cd))
    err_tight = float(jnp.max(jnp.abs(out - ref_packed)))
    assert err_tight < (2e-3 if bf16_gates else 1e-4), err_tight

    # Loose check: exact f32 module semantics (gap = bf16 folded tables + optional bf16 gate math).
    stripped = jax.block_until_ready(
        fixed_window_lstm_forward(sentence, tags, params, strip_padding=True))
    assert stripped.shape == (S, 2 * H), stripped.shape
    ref = jax.block_until_ready(reference_forward(sentence, tags, params))
    err_loose = float(jnp.max(jnp.abs(stripped - ref)))
    assert err_loose < (5e-3 if bf16_gates else 1e-3), err_loose


if __name__ == "__main__":
    key = jax.random.PRNGKey(0)

    # Config A: hidden a multiple of 128 (no lane padding), S not a multiple of any tile,
    # possibly multi-step grid on 2-TC chips -> exercises tiling/masking and the lane-dense fast path.
    vocab_words, vocab_tags = 50, 20
    word_dim, tag_dim, hidden_dim = 32, 32, 128
    S = 300
    kp, ksent, ktag, key = jax.random.split(key, 4)
    params = init_params(kp, vocab_words, vocab_tags, word_dim, tag_dim, hidden_dim)
    sentence = jax.random.randint(ksent, (S,), 0, vocab_words, dtype=jnp.int32)
    tags = jax.random.randint(ktag, (S,), 0, vocab_tags, dtype=jnp.int32)
    _check(sentence, tags, params)

    # Config B: module-default hidden_dim=100 (not a lane multiple) -> exercises the gate-padding
    # (padded-layout + optional stripped view) path on a single short sentence.
    hidden_dim_b = 100
    S_b = 8
    kp, ksent, ktag, key = jax.random.split(key, 4)
    params_b = init_params(kp, vocab_words, vocab_tags, word_dim, tag_dim, hidden_dim_b)
    sentence_b = jax.random.randint(ksent, (S_b,), 0, vocab_words, dtype=jnp.int32)
    tags_b = jax.random.randint(ktag, (S_b,), 0, vocab_tags, dtype=jnp.int32)
    _check(sentence_b, tags_b, params_b)

    print("KERNEL_OK")
</pallas_src>

<mosaic_0001>
module attributes {stable_mosaic.version = 11 : i64} {
  func.func @bilstm_gather_kernel(%arg0: i32, %arg1: memref<300x2xi32, #tpu.memory_space<vmem>>, %arg2: memref<70x768xbf16, #tpu.memory_space<vmem>>, %arg3: memref<1x768xf32, #tpu.memory_space<vmem>>, %arg4: memref<300x256xf32, #tpu.memory_space<vmem>>) attributes {dimension_semantics = [#tpu.dimension_semantics<parallel>], iteration_bounds = array<i64: 1>, scalar_prefetch = 0 : i64, scratch_operands = 0 : i64, tpu.core_type = #tpu.core_type<tc>, window_params = [{transform_indices = @transform_0, window_bounds = array<i64: 300, 2>}, {pipeline_mode = #tpu.pipeline_mode<synchronous>, transform_indices = @transform_1, window_bounds = array<i64: 70, 768>}, {pipeline_mode = #tpu.pipeline_mode<synchronous>, transform_indices = @transform_2, window_bounds = array<i64: 1, 768>}, {transform_indices = @transform_3, window_bounds = array<i64: 300, 256>}]} {
    %c0 = arith.constant 0 : index
    %c0_0 = arith.constant 0 : index
    %0 = vector.load %arg1[%c0, %c0_0] : memref<300x2xi32, #tpu.memory_space<vmem>>, vector<300x2xi32>
    %1 = tpu.iota {dimensions = array<i32: 1>} : vector<300x70xi32>
    %2 = vector.extract_strided_slice %0 {offsets = [0, 0], sizes = [300, 1], strides = [1, 1]} : vector<300x2xi32> to vector<300x1xi32>
    %3 = vector.broadcast %2 : vector<300x1xi32> to vector<300x70xi32>
    %4 = arith.cmpi eq, %1, %3 : vector<300x70xi32>
    %5 = vector.extract_strided_slice %0 {offsets = [0, 1], sizes = [300, 1], strides = [1, 1]} : vector<300x2xi32> to vector<300x1xi32>
    %6 = vector.broadcast %5 : vector<300x1xi32> to vector<300x70xi32>
    %7 = arith.cmpi eq, %1, %6 : vector<300x70xi32>
    %8 = arith.ori %4, %7 : vector<300x70xi1>
    %9 = arith.extui %8 : vector<300x70xi1> to vector<300x70xi32>
    %10 = arith.sitofp %9 : vector<300x70xi32> to vector<300x70xf32>
    %11 = arith.truncf %10 : vector<300x70xf32> to vector<300x70xbf16>
    %c0_1 = arith.constant 0 : index
    %c0_2 = arith.constant 0 : index
    %12 = vector.load %arg2[%c0_1, %c0_2] : memref<70x768xbf16, #tpu.memory_space<vmem>>, vector<70x384xbf16>
    %cst = arith.constant dense<0.000000e+00> : vector<300x384xf32>
    %13 = tpu.matmul %11, %12, %cst {dimension_numbers = #tpu.dot_dimension_numbers<[1], [0], [0], [1], [0, 0, 1, 1], [], []>} : vector<300x70xbf16>, vector<70x384xbf16>, vector<300x384xf32> -> vector<300x384xf32>
    %c0_3 = arith.constant 0 : index
    %c0_4 = arith.constant 0 : index
    %14 = vector.load %arg3[%c0_3, %c0_4] : memref<1x768xf32, #tpu.memory_space<vmem>>, vector<1x384xf32>
    %15 = vector.broadcast %14 : vector<1x384xf32> to vector<300x384xf32>
    %16 = arith.addf %13, %15 : vector<300x384xf32>
    %17 = vector.extract_strided_slice %16 {offsets = [0, 0], sizes = [300, 128], strides = [1, 1]} : vector<300x384xf32> to vector<300x128xf32>
    %18 = arith.negf %17 : vector<300x128xf32>
    %19 = math.exp %18 : vector<300x128xf32>
    %cst_5 = arith.constant 1.000000e+00 : f32
    %20 = vector.broadcast %cst_5 : f32 to vector<300x128xf32>
    %21 = arith.addf %20, %19 : vector<300x128xf32>
    %22 = arith.divf %20, %21 : vector<300x128xf32>
    %23 = vector.extract_strided_slice %16 {offsets = [0, 128], sizes = [300, 128], strides = [1, 1]} : vector<300x384xf32> to vector<300x128xf32>
    %24 = math.tanh %23 : vector<300x128xf32>
    %25 = vector.extract_strided_slice %16 {offsets = [0, 256], sizes = [300, 128], strides = [1, 1]} : vector<300x384xf32> to vector<300x128xf32>
    %26 = arith.negf %25 : vector<300x128xf32>
    %27 = math.exp %26 : vector<300x128xf32>
    %cst_6 = arith.constant 1.000000e+00 : f32
    %28 = vector.broadcast %cst_6 : f32 to vector<300x128xf32>
    %29 = arith.addf %28, %27 : vector<300x128xf32>
    %30 = arith.divf %28, %29 : vector<300x128xf32>
    %31 = arith.mulf %22, %24 : vector<300x128xf32>
    %32 = math.tanh %31 : vector<300x128xf32>
    %33 = arith.mulf %30, %32 : vector<300x128xf32>
    %c0_7 = arith.constant 0 : index
    %c0_8 = arith.constant 0 : index
    %34 = vector.load %arg4[%c0_7, %c0_8] : memref<300x256xf32, #tpu.memory_space<vmem>>, vector<300x128xf32>
    tpu.vector_store %arg4[%c0_7, %c0_8], %33 {strides = array<i32>} : memref<300x256xf32, #tpu.memory_space<vmem>>, vector<300x128xf32>,
    %c0_9 = arith.constant 0 : index
    %c384 = arith.constant 384 : index
    %35 = vector.load %arg2[%c0_9, %c384] : memref<70x768xbf16, #tpu.memory_space<vmem>>, vector<70x384xbf16>
    %cst_10 = arith.constant dense<0.000000e+00> : vector<300x384xf32>
    %36 = tpu.matmul %11, %35, %cst_10 {dimension_numbers = #tpu.dot_dimension_numbers<[1], [0], [0], [1], [0, 0, 1, 1], [], []>} : vector<300x70xbf16>, vector<70x384xbf16>, vector<300x384xf32> -> vector<300x384xf32>
    %c0_11 = arith.constant 0 : index
    %c384_12 = arith.constant 384 : index
    %37 = vector.load %arg3[%c0_11, %c384_12] : memref<1x768xf32, #tpu.memory_space<vmem>>, vector<1x384xf32>
    %38 = vector.broadcast %37 : vector<1x384xf32> to vector<300x384xf32>
    %39 = arith.addf %36, %38 : vector<300x384xf32>
    %40 = vector.extract_strided_slice %39 {offsets = [0, 0], sizes = [300, 128], strides = [1, 1]} : vector<300x384xf32> to vector<300x128xf32>
    %41 = arith.negf %40 : vector<300x128xf32>
    %42 = math.exp %41 : vector<300x128xf32>
    %cst_13 = arith.constant 1.000000e+00 : f32
    %43 = vector.broadcast %cst_13 : f32 to vector<300x128xf32>
    %44 = arith.addf %43, %42 : vector<300x128xf32>
    %45 = arith.divf %43, %44 : vector<300x128xf32>
    %46 = vector.extract_strided_slice %39 {offsets = [0, 128], sizes = [300, 128], strides = [1, 1]} : vector<300x384xf32> to vector<300x128xf32>
    %47 = math.tanh %46 : vector<300x128xf32>
    %48 = vector.extract_strided_slice %39 {offsets = [0, 256], sizes = [300, 128], strides = [1, 1]} : vector<300x384xf32> to vector<300x128xf32>
    %49 = arith.negf %48 : vector<300x128xf32>
    %50 = math.exp %49 : vector<300x128xf32>
    %cst_14 = arith.constant 1.000000e+00 : f32
    %51 = vector.broadcast %cst_14 : f32 to vector<300x128xf32>
    %52 = arith.addf %51, %50 : vector<300x128xf32>
    %53 = arith.divf %51, %52 : vector<300x128xf32>
    %54 = arith.mulf %45, %47 : vector<300x128xf32>
    %55 = math.tanh %54 : vector<300x128xf32>
    %56 = arith.mulf %53, %55 : vector<300x128xf32>
    %c0_15 = arith.constant 0 : index
    %c128 = arith.constant 128 : index
    %57 = vector.load %arg4[%c0_15, %c128] : memref<300x256xf32, #tpu.memory_space<vmem>>, vector<300x128xf32>
    tpu.vector_store %arg4[%c0_15, %c128], %56 {strides = array<i32>} : memref<300x256xf32, #tpu.memory_space<vmem>>, vector<300x128xf32>,
    return
  }
  func.func @transform_0(%arg0: i32) -> (i32, i32) {
    %c0_i32 = arith.constant 0 : i32
    %c0_i32_0 = arith.constant 0 : i32
    return %arg0, %c0_i32 : i32, i32
  }
  func.func @transform_1(%arg0: i32) -> (i32, i32) {
    %c0_i32 = arith.constant 0 : i32
    %c0_i32_0 = arith.constant 0 : i32
    %c0_i32_1 = arith.constant 0 : i32
    return %c0_i32, %c0_i32_0 : i32, i32
  }
  func.func @transform_2(%arg0: i32) -> (i32, i32) {
    %c0_i32 = arith.constant 0 : i32
    %c0_i32_0 = arith.constant 0 : i32
    %c0_i32_1 = arith.constant 0 : i32
    return %c0_i32, %c0_i32_0 : i32, i32
  }
  func.func @transform_3(%arg0: i32) -> (i32, i32) {
    %c0_i32 = arith.constant 0 : i32
    %c0_i32_0 = arith.constant 0 : i32
    return %arg0, %c0_i32 : i32, i32
  }
}

</mosaic_0001>

<llo_original>
// kernel: tpu_custom_call.1
$region0: #{tpu_custom_call.1}
  #allocation0 [shape = 'u32[]', space=smem, size = 0x4, offset = 0x4, fixed_abs, tag = 'smem constant byte address 0x4 - core index']
  #allocation1 [shape = 'u32[144,128]{1,0:T(1,128)}', space=vmem, size = 0x12000, scoped, tag = 'internal scratch']
  %s0 = inlined_call_operand.vmem [shape: s32[300,2], index: 0, kind: input, shape index: {}]
  %s1 = inlined_call_operand.vmem [shape: bf16[70,768], index: 1, kind: input, shape index: {}]
  %s2 = inlined_call_operand.vmem [shape: f32[1,768], index: 2, kind: input, shape index: {}]
  %s3 = inlined_call_operand.hbm [shape: f32[300,256], index: 3, kind: output, shape index: {}]
  %s4 = sld [smem:[#allocation0]]
  $region22: #{tpu_custom_call.1} parent=0
    _
  %s6 = ssub.s32 1, %s4
  %s7 = scalar_select 0, %s6, %s4
  $region1: #{tpu_custom_call.1} parent=0
    #allocation2 [shape = 'u8[311296]{0}', space=vmem, size = 0x4c000, scoped, tag = 'output window, operand 0, single buffered']
    #allocation3 [shape = 's32[1]{0}', space=sflag, size = 0x4, scoped, tag = 'scoped memory for tpu_custom_call.1']
    %8 = vsyncpa [#allocation3], 0
    // Predicated region
    $region2: #{tpu_custom_call.1} parent=1 // pred_check
      _
    $region3: #{tpu_custom_call.1} parent=1 // pred_check_branch
      %10 = sbr.rel (0) target = $region5
    $region4: #{tpu_custom_call.1} parent=1 // pred_region
      _
    $region5: #{tpu_custom_call.1} parent=1 // pred_fallthru
      _
    // Predicated region
    $region6: #{tpu_custom_call.1} parent=1 // pred_check
      _
    $region7: #{tpu_custom_call.1} parent=1 // pred_check_branch
      %12 = sbr.rel (0) target = $region9
    $region8: #{tpu_custom_call.1} parent=1 // pred_region
      _
    $region9: #{tpu_custom_call.1} parent=1 // pred_fallthru
      _
    // Predicated region
    $region10: #{tpu_custom_call.1} parent=1 // pred_check
      _
    $region11: #{tpu_custom_call.1} parent=1 // pred_check_branch
      %14 = sbr.rel (0) target = $region13
    $region12: #{tpu_custom_call.1} parent=1 // pred_region
      _
    $region13: #{tpu_custom_call.1} parent=1 // pred_fallthru
      _
    %v16 = vld [vmem:[%s0] sm:$0xff]
    %v17 = vld [vmem:[%s0 + $0x8] sm:$0xff]
    %v18 = vld [vmem:[%s0 + $0x10] sm:$0xff]
    %v19 = vld [vmem:[%s0 + $0x18] sm:$0xff]
    %v20 = vld [vmem:[%s0 + $0x20] sm:$0xff]
    %v21 = vld [vmem:[%s0 + $0x28] sm:$0xff]
    %v22 = vld [vmem:[%s0 + $0x30] sm:$0xff]
    %v23 = vld [vmem:[%s0 + $0x38] sm:$0xff]
    %v24 = vld [vmem:[%s0 + $0x40] sm:$0xff]
    %v25 = vld [vmem:[%s0 + $0x48] sm:$0xff]
    %v26 = vld [vmem:[%s0 + $0x50] sm:$0xff]
    %v27 = vld [vmem:[%s0 + $0x58] sm:$0xff]
    %v28 = vld [vmem:[%s0 + $0x60] sm:$0xff]
    %v29 = vld [vmem:[%s0 + $0x68] sm:$0xff]
    %v30 = vld [vmem:[%s0 + $0x70] sm:$0xff]
    %v31 = vld [vmem:[%s0 + $0x78] sm:$0xff]
    %v32 = vld [vmem:[%s0 + $0x80] sm:$0xff]
    %v33 = vld [vmem:[%s0 + $0x88] sm:$0xff]
    %v34 = vld [vmem:[%s0 + $0x90] sm:$0xff]
    %v35 = vld [vmem:[%s0 + $0x98] sm:$0xff]
    %v36 = vld [vmem:[%s0 + $0xa0] sm:$0xff]
    %v37 = vld [vmem:[%s0 + $0xa8] sm:$0xff]
    %v38 = vld [vmem:[%s0 + $0xb0] sm:$0xff]
    %v39 = vld [vmem:[%s0 + $0xb8] sm:$0xff]
    %v40 = vld [vmem:[%s0 + $0xc0] sm:$0xff]
    %v41 = vld [vmem:[%s0 + $0xc8] sm:$0xff]
    %v42 = vld [vmem:[%s0 + $0xd0] sm:$0xff]
    %v43 = vld [vmem:[%s0 + $0xd8] sm:$0xff]
    %v44 = vld [vmem:[%s0 + $0xe0] sm:$0xff]
    %v45 = vld [vmem:[%s0 + $0xe8] sm:$0xff]
    %v46 = vld [vmem:[%s0 + $0xf0] sm:$0xff]
    %v47 = vld [vmem:[%s0 + $0xf8] sm:$0xff]
    %v48 = vld [vmem:[%s0 + $0x100] sm:$0xff]
    %v49 = vld [vmem:[%s0 + $0x108] sm:$0xff]
    %v50 = vld [vmem:[%s0 + $0x110] sm:$0xff]
    %v51 = vld [vmem:[%s0 + $0x118] sm:$0xff]
    %v52 = vld [vmem:[%s0 + $0x120] sm:$0xff]
    %v53 = vld [vmem:[%s0 + $0x128] sm:$0xf]
    %v54 = vlaneseq
    %v55 = vand.u32 %v54, 127
    %56 = vset.pattern.permute.xlu0 0
    %57 = vperm.xlu0 %56, %v16
    %v58 = vpop.permute.xlu0 %57
    %59 = vset.pattern.permute.xlu0 0
    %60 = vperm.xlu0 %59, %v17
    %v61 = vpop.permute.xlu0 %60
    %62 = vset.pattern.permute.xlu0 0
    %63 = vperm.xlu0 %62, %v18
    %v64 = vpop.permute.xlu0 %63
    %65 = vset.pattern.permute.xlu0 0
    %66 = vperm.xlu0 %65, %v19
    %v67 = vpop.permute.xlu0 %66
    %68 = vset.pattern.permute.xlu0 0
    %69 = vperm.xlu0 %68, %v20
    %v70 = vpop.permute.xlu0 %69
    %71 = vset.pattern.permute.xlu0 0
    %72 = vperm.xlu0 %71, %v21
    %v73 = vpop.permute.xlu0 %72
    %74 = vset.pattern.permute.xlu0 0
    %75 = vperm.xlu0 %74, %v22
    %v76 = vpop.permute.xlu0 %75
    %77 = vset.pattern.permute.xlu0 0
    %78 = vperm.xlu0 %77, %v23
    %v79 = vpop.permute.xlu0 %78
    %80 = vset.pattern.permute.xlu0 0
    %81 = vperm.xlu0 %80, %v24
    %v82 = vpop.permute.xlu0 %81
    %83 = vset.pattern.permute.xlu0 0
    %84 = vperm.xlu0 %83, %v25
    %v85 = vpop.permute.xlu0 %84
    %86 = vset.pattern.permute.xlu0 0
    %87 = vperm.xlu0 %86, %v26
    %v88 = vpop.permute.xlu0 %87
    %89 = vset.pattern.permute.xlu0 0
    %90 = vperm.xlu0 %89, %v27
    %v91 = vpop.permute.xlu0 %90
    %92 = vset.pattern.permute.xlu0 0
    %93 = vperm.xlu0 %92, %v28
    %v94 = vpop.permute.xlu0 %93
    %95 = vset.pattern.permute.xlu0 0
    %96 = vperm.xlu0 %95, %v29
    %v97 = vpop.permute.xlu0 %96
    %98 = vset.pattern.permute.xlu0 0
    %99 = vperm.xlu0 %98, %v30
    %v100 = vpop.permute.xlu0 %99
    %101 = vset.pattern.permute.xlu0 0
    %102 = vperm.xlu0 %101, %v31
    %v103 = vpop.permute.xlu0 %102
    %104 = vset.pattern.permute.xlu0 0
    %105 = vperm.xlu0 %104, %v32
    %v106 = vpop.permute.xlu0 %105
    %107 = vset.pattern.permute.xlu0 0
    %108 = vperm.xlu0 %107, %v33
    %v109 = vpop.permute.xlu0 %108
    %110 = vset.pattern.permute.xlu0 0
    %111 = vperm.xlu0 %110, %v34
    %v112 = vpop.permute.xlu0 %111
    %113 = vset.pattern.permute.xlu0 0
    %114 = vperm.xlu0 %113, %v35
    %v115 = vpop.permute.xlu0 %114
    %116 = vset.pattern.permute.xlu0 0
    %117 = vperm.xlu0 %116, %v36
    %v118 = vpop.permute.xlu0 %117
    %119 = vset.pattern.permute.xlu0 0
    %120 = vperm.xlu0 %119, %v37
    %v121 = vpop.permute.xlu0 %120
    %122 = vset.pattern.permute.xlu0 0
    %123 = vperm.xlu0 %122, %v38
    %v124 = vpop.permute.xlu0 %123
    %125 = vset.pattern.permute.xlu0 0
    %126 = vperm.xlu0 %125, %v39
    %v127 = vpop.permute.xlu0 %126
    %128 = vset.pattern.permute.xlu0 0
    %129 = vperm.xlu0 %128, %v40
    %v130 = vpop.permute.xlu0 %129
    %131 = vset.pattern.permute.xlu0 0
    %132 = vperm.xlu0 %131, %v41
    %v133 = vpop.permute.xlu0 %132
    %134 = vset.pattern.permute.xlu0 0
    %135 = vperm.xlu0 %134, %v42
    %v136 = vpop.permute.xlu0 %135
    %137 = vset.pattern.permute.xlu0 0
    %138 = vperm.xlu0 %137, %v43
    %v139 = vpop.permute.xlu0 %138
    %140 = vset.pattern.permute.xlu0 0
    %141 = vperm.xlu0 %140, %v44
    %v142 = vpop.permute.xlu0 %141
    %143 = vset.pattern.permute.xlu0 0
    %144 = vperm.xlu0 %143, %v45
    %v145 = vpop.permute.xlu0 %144
    %146 = vset.pattern.permute.xlu0 0
    %147 = vperm.xlu0 %146, %v46
    %v148 = vpop.permute.xlu0 %147
    %149 = vset.pattern.permute.xlu0 0
    %150 = vperm.xlu0 %149, %v47
    %v151 = vpop.permute.xlu0 %150
    %152 = vset.pattern.permute.xlu0 0
    %153 = vperm.xlu0 %152, %v48
    %v154 = vpop.permute.xlu0 %153
    %155 = vset.pattern.permute.xlu0 0
    %156 = vperm.xlu0 %155, %v49
    %v157 = vpop.permute.xlu0 %156
    %158 = vset.pattern.permute.xlu0 0
    %159 = vperm.xlu0 %158, %v50
    %v160 = vpop.permute.xlu0 %159
    %161 = vset.pattern.permute.xlu0 0
    %162 = vperm.xlu0 %161, %v51
    %v163 = vpop.permute.xlu0 %162
    %164 = vset.pattern.permute.xlu0 0
    %165 = vperm.xlu0 %164, %v52
    %v166 = vpop.permute.xlu0 %165
    %167 = vset.pattern.permute.xlu0 0
    %168 = vperm.xlu0 %167, %v53
    %v169 = vpop.permute.xlu0 %168
    %vm170 = vcmp.eq.s32.totalorder %v55, %v58
    %vm171 = vcmp.eq.s32.totalorder %v55, %v61
    %vm172 = vcmp.eq.s32.totalorder %v55, %v64
    %vm173 = vcmp.eq.s32.totalorder %v55, %v67
    %vm174 = vcmp.eq.s32.totalorder %v55, %v70
    %vm175 = vcmp.eq.s32.totalorder %v55, %v73
    %vm176 = vcmp.eq.s32.totalorder %v55, %v76
    %vm177 = vcmp.eq.s32.totalorder %v55, %v79
    %vm178 = vcmp.eq.s32.totalorder %v55, %v82
    %vm179 = vcmp.eq.s32.totalorder %v55, %v85
    %vm180 = vcmp.eq.s32.totalorder %v55, %v88
    %vm181 = vcmp.eq.s32.totalorder %v55, %v91
    %vm182 = vcmp.eq.s32.totalorder %v55, %v94
    %vm183 = vcmp.eq.s32.totalorder %v55, %v97
    %vm184 = vcmp.eq.s32.totalorder %v55, %v100
    %vm185 = vcmp.eq.s32.totalorder %v55, %v103
    %vm186 = vcmp.eq.s32.totalorder %v55, %v106
    %vm187 = vcmp.eq.s32.totalorder %v55, %v109
    %vm188 = vcmp.eq.s32.totalorder %v55, %v112
    %vm189 = vcmp.eq.s32.totalorder %v55, %v115
    %vm190 = vcmp.eq.s32.totalorder %v55, %v118
    %vm191 = vcmp.eq.s32.totalorder %v55, %v121
    %vm192 = vcmp.eq.s32.totalorder %v55, %v124
    %vm193 = vcmp.eq.s32.totalorder %v55, %v127
    %vm194 = vcmp.eq.s32.totalorder %v55, %v130
    %vm195 = vcmp.eq.s32.totalorder %v55, %v133
    %vm196 = vcmp.eq.s32.totalorder %v55, %v136
    %vm197 = vcmp.eq.s32.totalorder %v55, %v139
    %vm198 = vcmp.eq.s32.totalorder %v55, %v142
    %vm199 = vcmp.eq.s32.totalorder %v55, %v145
    %vm200 = vcmp.eq.s32.totalorder %v55, %v148
    %vm201 = vcmp.eq.s32.totalorder %v55, %v151
    %vm202 = vcmp.eq.s32.totalorder %v55, %v154
    %vm203 = vcmp.eq.s32.totalorder %v55, %v157
    %vm204 = vcmp.eq.s32.totalorder %v55, %v160
    %vm205 = vcmp.eq.s32.totalorder %v55, %v163
    %vm206 = vcmp.eq.s32.totalorder %v55, %v166
    %vm207 = vcmp.eq.s32.totalorder %v55, %v169
    %208 = vset.pattern.permute.xlu0 1
    %209 = vperm.xlu0 %208, %v16
    %v210 = vpop.permute.xlu0 %209
    %211 = vset.pattern.permute.xlu0 1
    %212 = vperm.xlu0 %211, %v17
    %v213 = vpop.permute.xlu0 %212
    %214 = vset.pattern.permute.xlu0 1
    %215 = vperm.xlu0 %214, %v18
    %v216 = vpop.permute.xlu0 %215
    %217 = vset.pattern.permute.xlu0 1
    %218 = vperm.xlu0 %217, %v19
    %v219 = vpop.permute.xlu0 %218
    %220 = vset.pattern.permute.xlu0 1
    %221 = vperm.xlu0 %220, %v20
    %v222 = vpop.permute.xlu0 %221
    %223 = vset.pattern.permute.xlu0 1
    %224 = vperm.xlu0 %223, %v21
    %v225 = vpop.permute.xlu0 %224
    %226 = vset.pattern.permute.xlu0 1
    %227 = vperm.xlu0 %226, %v22
    %v228 = vpop.permute.xlu0 %227
    %229 = vset.pattern.permute.xlu0 1
    %230 = vperm.xlu0 %229, %v23
    %v231 = vpop.permute.xlu0 %230
    %232 = vset.pattern.permute.xlu0 1
    %233 = vperm.xlu0 %232, %v24
    %v234 = vpop.permute.xlu0 %233
    %235 = vset.pattern.permute.xlu0 1
    %236 = vperm.xlu0 %235, %v25
    %v237 = vpop.permute.xlu0 %236
    %238 = vset.pattern.permute.xlu0 1
    %239 = vperm.xlu0 %238, %v26
    %v240 = vpop.permute.xlu0 %239
    %241 = vset.pattern.permute.xlu0 1
    %242 = vperm.xlu0 %241, %v27
    %v243 = vpop.permute.xlu0 %242
    %244 = vset.pattern.permute.xlu0 1
    %245 = vperm.xlu0 %244, %v28
    %v246 = vpop.permute.xlu0 %245
    %247 = vset.pattern.permute.xlu0 1
    %248 = vperm.xlu0 %247, %v29
    %v249 = vpop.permute.xlu0 %248
    %250 = vset.pattern.permute.xlu0 1
    %251 = vperm.xlu0 %250, %v30
    %v252 = vpop.permute.xlu0 %251
    %253 = vset.pattern.permute.xlu0 1
    %254 = vperm.xlu0 %253, %v31
    %v255 = vpop.permute.xlu0 %254
    %256 = vset.pattern.permute.xlu0 1
    %257 = vperm.xlu0 %256, %v32
    %v258 = vpop.permute.xlu0 %257
    %259 = vset.pattern.permute.xlu0 1
    %260 = vperm.xlu0 %259, %v33
    %v261 = vpop.permute.xlu0 %260
    %262 = vset.pattern.permute.xlu0 1
    %263 = vperm.xlu0 %262, %v34
    %v264 = vpop.permute.xlu0 %263
    %265 = vset.pattern.permute.xlu0 1
    %266 = vperm.xlu0 %265, %v35
    %v267 = vpop.permute.xlu0 %266
    %268 = vset.pattern.permute.xlu0 1
    %269 = vperm.xlu0 %268, %v36
    %v270 = vpop.permute.xlu0 %269
    %271 = vset.pattern.permute.xlu0 1
    %272 = vperm.xlu0 %271, %v37
    %v273 = vpop.permute.xlu0 %272
    %274 = vset.pattern.permute.xlu0 1
    %275 = vperm.xlu0 %274, %v38
    %v276 = vpop.permute.xlu0 %275
    %277 = vset.pattern.permute.xlu0 1
    %278 = vperm.xlu0 %277, %v39
    %v279 = vpop.permute.xlu0 %278
    %280 = vset.pattern.permute.xlu0 1
    %281 = vperm.xlu0 %280, %v40
    %v282 = vpop.permute.xlu0 %281
    %283 = vset.pattern.permute.xlu0 1
    %284 = vperm.xlu0 %283, %v41
    %v285 = vpop.permute.xlu0 %284
    %286 = vset.pattern.permute.xlu0 1
    %287 = vperm.xlu0 %286, %v42
    %v288 = vpop.permute.xlu0 %287
    %289 = vset.pattern.permute.xlu0 1
    %290 = vperm.xlu0 %289, %v43
    %v291 = vpop.permute.xlu0 %290
    %292 = vset.pattern.permute.xlu0 1
    %293 = vperm.xlu0 %292, %v44
    %v294 = vpop.permute.xlu0 %293
    %295 = vset.pattern.permute.xlu0 1
    %296 = vperm.xlu0 %295, %v45
    %v297 = vpop.permute.xlu0 %296
    %298 = vset.pattern.permute.xlu0 1
    %299 = vperm.xlu0 %298, %v46
    %v300 = vpop.permute.xlu0 %299
    %301 = vset.pattern.permute.xlu0 1
    %302 = vperm.xlu0 %301, %v47
    %v303 = vpop.permute.xlu0 %302
    %304 = vset.pattern.permute.xlu0 1
    %305 = vperm.xlu0 %304, %v48
    %v306 = vpop.permute.xlu0 %305
    %307 = vset.pattern.permute.xlu0 1
    %308 = vperm.xlu0 %307, %v49
    %v309 = vpop.permute.xlu0 %308
    %310 = vset.pattern.permute.xlu0 1
    %311 = vperm.xlu0 %310, %v50
    %v312 = vpop.permute.xlu0 %311
    %313 = vset.pattern.permute.xlu0 1
    %314 = vperm.xlu0 %313, %v51
    %v315 = vpop.permute.xlu0 %314
    %316 = vset.pattern.permute.xlu0 1
    %317 = vperm.xlu0 %316, %v52
    %v318 = vpop.permute.xlu0 %317
    %319 = vset.pattern.permute.xlu0 1
    %320 = vperm.xlu0 %319, %v53
    %v321 = vpop.permute.xlu0 %320
    %vm322 = vcmp.eq.s32.totalorder %v55, %v210
    %vm323 = vcmp.eq.s32.totalorder %v55, %v213
    %vm324 = vcmp.eq.s32.totalorder %v55, %v216
    %vm325 = vcmp.eq.s32.totalorder %v55, %v219
    %vm326 = vcmp.eq.s32.totalorder %v55, %v222
    %vm327 = vcmp.eq.s32.totalorder %v55, %v225
    %vm328 = vcmp.eq.s32.totalorder %v55, %v228
    %vm329 = vcmp.eq.s32.totalorder %v55, %v231
    %vm330 = vcmp.eq.s32.totalorder %v55, %v234
    %vm331 = vcmp.eq.s32.totalorder %v55, %v237
    %vm332 = vcmp.eq.s32.totalorder %v55, %v240
    %vm333 = vcmp.eq.s32.totalorder %v55, %v243
    %vm334 = vcmp.eq.s32.totalorder %v55, %v246
    %vm335 = vcmp.eq.s32.totalorder %v55, %v249
    %vm336 = vcmp.eq.s32.totalorder %v55, %v252
    %vm337 = vcmp.eq.s32.totalorder %v55, %v255
    %vm338 = vcmp.eq.s32.totalorder %v55, %v258
    %vm339 = vcmp.eq.s32.totalorder %v55, %v261
    %vm340 = vcmp.eq.s32.totalorder %v55, %v264
    %vm341 = vcmp.eq.s32.totalorder %v55, %v267
    %vm342 = vcmp.eq.s32.totalorder %v55, %v270
    %vm343 = vcmp.eq.s32.totalorder %v55, %v273
    %vm344 = vcmp.eq.s32.totalorder %v55, %v276
    %vm345 = vcmp.eq.s32.totalorder %v55, %v279
    %vm346 = vcmp.eq.s32.totalorder %v55, %v282
    %vm347 = vcmp.eq.s32.totalorder %v55, %v285
    %vm348 = vcmp.eq.s32.totalorder %v55, %v288
    %vm349 = vcmp.eq.s32.totalorder %v55, %v291
    %vm350 = vcmp.eq.s32.totalorder %v55, %v294
    %vm351 = vcmp.eq.s32.totalorder %v55, %v297
    %vm352 = vcmp.eq.s32.totalorder %v55, %v300
    %vm353 = vcmp.eq.s32.totalorder %v55, %v303
    %vm354 = vcmp.eq.s32.totalorder %v55, %v306
    %vm355 = vcmp.eq.s32.totalorder %v55, %v309
    %vm356 = vcmp.eq.s32.totalorder %v55, %v312
    %vm357 = vcmp.eq.s32.totalorder %v55, %v315
    %vm358 = vcmp.eq.s32.totalorder %v55, %v318
    %vm359 = vcmp.eq.s32.totalorder %v55, %v321
    %vm360 = vmor %vm170, %vm322
    %vm361 = vmor %vm171, %vm323
    %vm362 = vmor %vm172, %vm324
    %vm363 = vmor %vm173, %vm325
    %vm364 = vmor %vm174, %vm326
    %vm365 = vmor %vm175, %vm327
    %vm366 = vmor %vm176, %vm328
    %vm367 = vmor %vm177, %vm329
    %vm368 = vmor %vm178, %vm330
    %vm369 = vmor %vm179, %vm331
    %vm370 = vmor %vm180, %vm332
    %vm371 = vmor %vm181, %vm333
    %vm372 = vmor %vm182, %vm334
    %vm373 = vmor %vm183, %vm335
    %vm374 = vmor %vm184, %vm336
    %vm375 = vmor %vm185, %vm337
    %vm376 = vmor %vm186, %vm338
    %vm377 = vmor %vm187, %vm339
    %vm378 = vmor %vm188, %vm340
    %vm379 = vmor %vm189, %vm341
    %vm380 = vmor %vm190, %vm342
    %vm381 = vmor %vm191, %vm343
    %vm382 = vmor %vm192, %vm344
    %vm383 = vmor %vm193, %vm345
    %vm384 = vmor %vm194, %vm346
    %vm385 = vmor %vm195, %vm347
    %vm386 = vmor %vm196, %vm348
    %vm387 = vmor %vm197, %vm349
    %vm388 = vmor %vm198, %vm350
    %vm389 = vmor %vm199, %vm351
    %vm390 = vmor %vm200, %vm352
    %vm391 = vmor %vm201, %vm353
    %vm392 = vmor %vm202, %vm354
    %vm393 = vmor %vm203, %vm355
    %vm394 = vmor %vm204, %vm356
    %vm395 = vmor %vm205, %vm357
    %vm396 = vmor %vm206, %vm358
    %vm397 = vmor %vm207, %vm359
    %v398 = vsel %vm360, 1, 0
    %v399 = vsel %vm361, 1, 0
    %v400 = vsel %vm362, 1, 0
    %v401 = vsel %vm363, 1, 0
    %v402 = vsel %vm364, 1, 0
    %v403 = vsel %vm365, 1, 0
    %v404 = vsel %vm366, 1, 0
    %v405 = vsel %vm367, 1, 0
    %v406 = vsel %vm368, 1, 0
    %v407 = vsel %vm369, 1, 0
    %v408 = vsel %vm370, 1, 0
    %v409 = vsel %vm371, 1, 0
    %v410 = vsel %vm372, 1, 0
    %v411 = vsel %vm373, 1, 0
    %v412 = vsel %vm374, 1, 0
    %v413 = vsel %vm375, 1, 0
    %v414 = vsel %vm376, 1, 0
    %v415 = vsel %vm377, 1, 0
    %v416 = vsel %vm378, 1, 0
    %v417 = vsel %vm379, 1, 0
    %v418 = vsel %vm380, 1, 0
    %v419 = vsel %vm381, 1, 0
    %v420 = vsel %vm382, 1, 0
    %v421 = vsel %vm383, 1, 0
    %v422 = vsel %vm384, 1, 0
    %v423 = vsel %vm385, 1, 0
    %v424 = vsel %vm386, 1, 0
    %v425 = vsel %vm387, 1, 0
    %v426 = vsel %vm388, 1, 0
    %v427 = vsel %vm389, 1, 0
    %v428 = vsel %vm390, 1, 0
    %v429 = vsel %vm391, 1, 0
    %v430 = vsel %vm392, 1, 0
    %v431 = vsel %vm393, 1, 0
    %v432 = vsel %vm394, 1, 0
    %v433 = vsel %vm395, 1, 0
    %v434 = vsel %vm396, 1, 0
    %v435 = vsel %vm397, 1, 0
    %v436 = vcvt.s32.f32 %v398
    %v437 = vcvt.s32.f32 %v399
    %v438 = vcvt.s32.f32 %v400
    %v439 = vcvt.s32.f32 %v401
    %v440 = vcvt.s32.f32 %v402
    %v441 = vcvt.s32.f32 %v403
    %v442 = vcvt.s32.f32 %v404
    %v443 = vcvt.s32.f32 %v405
    %v444 = vcvt.s32.f32 %v406
    %v445 = vcvt.s32.f32 %v407
    %v446 = vcvt.s32.f32 %v408
    %v447 = vcvt.s32.f32 %v409
    %v448 = vcvt.s32.f32 %v410
    %v449 = vcvt.s32.f32 %v411
    %v450 = vcvt.s32.f32 %v412
    %v451 = vcvt.s32.f32 %v413
    %v452 = vcvt.s32.f32 %v414
    %v453 = vcvt.s32.f32 %v415
    %v454 = vcvt.s32.f32 %v416
    %v455 = vcvt.s32.f32 %v417
    %v456 = vcvt.s32.f32 %v418
    %v457 = vcvt.s32.f32 %v419
    %v458 = vcvt.s32.f32 %v420
    %v459 = vcvt.s32.f32 %v421
    %v460 = vcvt.s32.f32 %v422
    %v461 = vcvt.s32.f32 %v423
    %v462 = vcvt.s32.f32 %v424
    %v463 = vcvt.s32.f32 %v425
    %v464 = vcvt.s32.f32 %v426
    %v465 = vcvt.s32.f32 %v427
    %v466 = vcvt.s32.f32 %v428
    %v467 = vcvt.s32.f32 %v429
    %v468 = vcvt.s32.f32 %v430
    %v469 = vcvt.s32.f32 %v431
    %v470 = vcvt.s32.f32 %v432
    %v471 = vcvt.s32.f32 %v433
    %v472 = vcvt.s32.f32 %v434
    %v473 = vcvt.s32.f32 %v435
    %v474 = vpack.c.bf16 %v437, %v436
    %v475 = vpack.c.bf16 %v439, %v438
    %v476 = vpack.c.bf16 %v441, %v440
    %v477 = vpack.c.bf16 %v443, %v442
    %v478 = vpack.c.bf16 %v445, %v444
    %v479 = vpack.c.bf16 %v447, %v446
    %v480 = vpack.c.bf16 %v449, %v448
    %v481 = vpack.c.bf16 %v451, %v450
    %v482 = vpack.c.bf16 %v453, %v452
    %v483 = vpack.c.bf16 %v455, %v454
    %v484 = vpack.c.bf16 %v457, %v456
    %v485 = vpack.c.bf16 %v459, %v458
    %v486 = vpack.c.bf16 %v461, %v460
    %v487 = vpack.c.bf16 %v463, %v462
    %v488 = vpack.c.bf16 %v465, %v464
    %v489 = vpack.c.bf16 %v467, %v466
    %v490 = vpack.c.bf16 %v469, %v468
    %v491 = vpack.c.bf16 %v471, %v470
    %v492 = vpack.c.bf16 %v473, %v472
    %v493 = vld [vmem:[%s1] sm:$0xff]
    %v494 = vld [vmem:[%s1 + $0x8] sm:$0xf]
    %v495 = vld [vmem:[%s1 + $0x18] sm:$0xff]
    %v496 = vld [vmem:[%s1 + $0x20] sm:$0xf]
    %v497 = vld [vmem:[%s1 + $0x30] sm:$0xff]
    %v498 = vld [vmem:[%s1 + $0x38] sm:$0xf]
    %v499 = vld [vmem:[%s1 + $0x48] sm:$0xff]
    %v500 = vld [vmem:[%s1 + $0x50] sm:$0xf]
    %v501 = vld [vmem:[%s1 + $0x60] sm:$0xff]
    %v502 = vld [vmem:[%s1 + $0x68] sm:$0xf]
    %v503 = vld [vmem:[%s1 + $0x78] sm:$0xff]
    %v504 = vld [vmem:[%s1 + $0x80] sm:$0xf]
    %v505 = vld [vmem:[%s1 + $0x90] sm:$0xff]
    %v506 = vld [vmem:[%s1 + $0x98] sm:$0xf]
    %v507 = vld [vmem:[%s1 + $0xa8] sm:$0xff]
    %v508 = vld [vmem:[%s1 + $0xb0] sm:$0xf]
    %v509 = vld [vmem:[%s1 + $0xc0] sm:$0x77]
    %v510 = vld [vmem:[%s1 + $0xc8] sm:$0x7]
    %v511 = vld [vmem:[%s2] sm:$0x7]
    %v513 = vlaneseq
    %v514 = vshrl.u32 %v513, 7
    %v515 = vsub.s32 0, %v514
    %v516 = vrot.slane %v511, %v515
    %v517 = vlaneseq
    %v518 = vshrl.u32 %v517, 7
    %v519 = vsub.s32 1, %v518
    %v520 = vrot.slane %v511, %v519
    %v521 = vlaneseq
    %v522 = vshrl.u32 %v521, 7
    %v523 = vsub.s32 2, %v522
    %v524 = vrot.slane %v511, %v523
    %v546 = vunpack.c.l.b16 %v493
    %v547 = vunpack.c.h.b16 %v493
    %v548 = vunpack.c.l.b16 %v494
    %v549 = vunpack.c.l.b16 %v495
    %v550 = vunpack.c.h.b16 %v495
    %v551 = vunpack.c.l.b16 %v496
    %v552 = vunpack.c.l.b16 %v497
    %v553 = vunpack.c.h.b16 %v497
    %v554 = vunpack.c.l.b16 %v498
    %v555 = vunpack.c.l.b16 %v499
    %v556 = vunpack.c.h.b16 %v499
    %v557 = vunpack.c.l.b16 %v500
    %v558 = vunpack.c.l.b16 %v501
    %v559 = vunpack.c.h.b16 %v501
    %v560 = vunpack.c.l.b16 %v502
    %v561 = vunpack.c.l.b16 %v503
    %v562 = vunpack.c.h.b16 %v503
    %v563 = vunpack.c.l.b16 %v504
    %v564 = vunpack.c.l.b16 %v505
    %v565 = vunpack.c.h.b16 %v505
    %v566 = vunpack.c.l.b16 %v506
    %v567 = vunpack.c.l.b16 %v507
    %v568 = vunpack.c.h.b16 %v507
    %v569 = vunpack.c.l.b16 %v508
    %v570 = vunpack.c.l.b16 %v509
    %v571 = vunpack.c.h.b16 %v509
    %v572 = vunpack.c.l.b16 %v510
    %v573 = vpack.c.b16 %v549, %v546
    %v574 = vpack.c.b16 %v550, %v547
    %v575 = vpack.c.b16 %v551, %v548
    %v576 = vpack.c.b16 %v555, %v552
    %v577 = vpack.c.b16 %v556, %v553
    %v578 = vpack.c.b16 %v557, %v554
    %v579 = vpack.c.b16 %v561, %v558
    %v580 = vpack.c.b16 %v562, %v559
    %v581 = vpack.c.b16 %v563, %v560
    %v582 = vpack.c.b16 %v567, %v564
    %v583 = vpack.c.b16 %v568, %v565
    %v584 = vpack.c.b16 %v569, %v566
    %v585 = vpack.c.b16 %v570, %v570
    %v586 = vpack.c.b16 %v571, %v571
    %v587 = vpack.c.b16 %v572, %v572
    %vm600 = vcmask 572416
    %v602 = vsel %vm600, %v474, 0
    %v605 = vsel %vm600, %v475, 0
    %v608 = vsel %vm600, %v476, 0
    %v611 = vsel %vm600, %v477, 0
    %v614 = vsel %vm600, %v478, 0
    %v617 = vsel %vm600, %v479, 0
    %v620 = vsel %vm600, %v480, 0
    %v623 = vsel %vm600, %v481, 0
    %v626 = vsel %vm600, %v482, 0
    %v629 = vsel %vm600, %v483, 0
    %v632 = vsel %vm600, %v484, 0
    %v635 = vsel %vm600, %v485, 0
    %v638 = vsel %vm600, %v486, 0
    %v641 = vsel %vm600, %v487, 0
    %v644 = vsel %vm600, %v488, 0
    %v647 = vsel %vm600, %v489, 0
    %v650 = vsel %vm600, %v490, 0
    %v653 = vsel %vm600, %v491, 0
    %v656 = vsel %vm600, %v492, 0
    %vm658 = vcmask 1042432
    %v660 = vsel %vm658, %v585, 0
    %v663 = vsel %vm658, %v586, 0
    %v666 = vsel %vm658, %v587, 0
    %668 = vmatprep.subr.bf16.mxu0 %v574
    %669 = vmatpush1.bf16.msra.mxu0 %v573
    %670 = vmatprep.subr.bf16.mxu0 %v577
    %671 = vmatpush1.bf16.msra.mxu0 %v576
    %672 = vmatprep.subr.bf16.mxu0 %v580
    %673 = vmatpush1.bf16.msra.mxu0 %v579
    %674 = vmatprep.subr.bf16.mxu0 %v583
    %675 = vmatpush1.bf16.msra.mxu0 %v582
    %676 = vmatprep.subr.bf16.mxu0 %v663
    %677 = vmatpush1.bf16.msra.mxu0 %v660
    %678 = vmatprep.subr.bf16.mxu0 0
    %679 = vmatpush1.bf16.msra.mxu0 0
    %680 = vmatprep.subr.bf16.mxu0 0
    %681 = vmatpush1.bf16.msra.mxu0 0
    %682 = vmatprep.subr.bf16.mxu0 0
    %683 = vmatpush1.bf16.msra.mxu0 0
    %684 = vmatprep.subr.bf16.mxu0 0
    %685 = vmatpush1.bf16.msra.mxu0 0
    %686 = vmatprep.subr.bf16.mxu0 0
    %687 = vmatpush1.bf16.msra.mxu0 0
    %688 = vmatprep.subr.bf16.mxu0 0
    %689 = vmatpush1.bf16.msra.mxu0 0
    %690 = vmatprep.subr.bf16.mxu0 0
    %691 = vmatpush1.bf16.msra.mxu0 0
    %692 = vmatprep.subr.bf16.mxu0 0
    %693 = vmatpush1.bf16.msra.mxu0 0
    %694 = vmatprep.subr.bf16.mxu0 0
    %695 = vmatpush1.bf16.msra.mxu0 0
    %696 = vmatprep.subr.bf16.mxu0 0
    %697 = vmatpush1.bf16.msra.mxu0 0
    %698 = vmatprep.subr.bf16.mxu0 0
    %699 = vmatpush1.bf16.msra.mxu0 0
    %700 = vmatprep.mubr.bf16.mxu0 0
    %701 = vmatmul.mubr.bf16.gmra.mrb[0].mxu0 %v602
    %v702 = vpop.f32.mrb[0].mxu0
    %v703 = vadd.f32 %v516, %v702
    %v704 = vpop.f32.mrb[0].mxu0
    %v705 = vadd.f32 %v520, %v704
    %v706 = vpop.f32.mrb[0].mxu0
    %v707 = vadd.f32 %v516, %v706
    %v708 = vpop.f32.mrb[0].mxu0
    %v709 = vadd.f32 %v520, %v708
    %710 = vmatprep.mubr.bf16.mxu0 0
    %711 = vmatmul.mubr.bf16.gmra.mrb[0].mxu0 %v605
    %v712 = vpop.f32.mrb[0].mxu0
    %v713 = vadd.f32 %v516, %v712
    %v714 = vpop.f32.mrb[0].mxu0
    %v715 = vadd.f32 %v520, %v714
    %v716 = vpop.f32.mrb[0].mxu0
    %v717 = vadd.f32 %v516, %v716
    %v718 = vpop.f32.mrb[0].mxu0
    %v719 = vadd.f32 %v520, %v718
    %720 = vmatprep.mubr.bf16.mxu0 0
    %721 = vmatmul.mubr.bf16.gmra.mrb[0].mxu0 %v608
    %v722 = vpop.f32.mrb[0].mxu0
    %v723 = vadd.f32 %v516, %v722
    %v724 = vpop.f32.mrb[0].mxu0
    %v725 = vadd.f32 %v520, %v724
    %v726 = vpop.f32.mrb[0].mxu0
    %v727 = vadd.f32 %v516, %v726
    %v728 = vpop.f32.mrb[0].mxu0
    %v729 = vadd.f32 %v520, %v728
    %730 = vmatprep.mubr.bf16.mxu0 0
    %731 = vmatmul.mubr.bf16.gmra.mrb[0].mxu0 %v611
    %v732 = vpop.f32.mrb[0].mxu0
    %v733 = vadd.f32 %v516, %v732
    %v734 = vpop.f32.mrb[0].mxu0
    %v735 = vadd.f32 %v520, %v734
    %v736 = vpop.f32.mrb[0].mxu0
    %v737 = vadd.f32 %v516, %v736
    %v738 = vpop.f32.mrb[0].mxu0
    %v739 = vadd.f32 %v520, %v738
    %740 = vmatprep.mubr.bf16.mxu0 0
    %741 = vmatmul.mubr.bf16.gmra.mrb[0].mxu0 %v614
    %v742 = vpop.f32.mrb[0].mxu0
    %v743 = vadd.f32 %v516, %v742
    %v744 = vpop.f32.mrb[0].mxu0
    %v745 = vadd.f32 %v520, %v744
    %v746 = vpop.f32.mrb[0].mxu0
    %v747 = vadd.f32 %v516, %v746
    %v748 = vpop.f32.mrb[0].mxu0
    %v749 = vadd.f32 %v520, %v748
    %750 = vmatprep.mubr.bf16.mxu0 0
    %751 = vmatmul.mubr.bf16.gmra.mrb[0].mxu0 %v617
    %v752 = vpop.f32.mrb[0].mxu0
    %v753 = vadd.f32 %v516, %v752
    %v754 = vpop.f32.mrb[0].mxu0
    %v755 = vadd.f32 %v520, %v754
    %v756 = vpop.f32.mrb[0].mxu0
    %v757 = vadd.f32 %v516, %v756
    %v758 = vpop.f32.mrb[0].mxu0
    %v759 = vadd.f32 %v520, %v758
    %760 = vmatprep.mubr.bf16.mxu0 0
    %761 = vmatmul.mubr.bf16.gmra.mrb[0].mxu0 %v620
    %v762 = vpop.f32.mrb[0].mxu0
    %v763 = vadd.f32 %v516, %v762
    %v764 = vpop.f32.mrb[0].mxu0
    %v765 = vadd.f32 %v520, %v764
    %v766 = vpop.f32.mrb[0].mxu0
    %v767 = vadd.f32 %v516, %v766
    %v768 = vpop.f32.mrb[0].mxu0
    %v769 = vadd.f32 %v520, %v768
    %770 = vmatprep.mubr.bf16.mxu0 0
    %771 = vmatmul.mubr.bf16.gmra.mrb[0].mxu0 %v623
    %v772 = vpop.f32.mrb[0].mxu0
    %v773 = vadd.f32 %v516, %v772
    %v774 = vpop.f32.mrb[0].mxu0
    %v775 = vadd.f32 %v520, %v774
    %v776 = vpop.f32.mrb[0].mxu0
    %v777 = vadd.f32 %v516, %v776
    %v778 = vpop.f32.mrb[0].mxu0
    %v779 = vadd.f32 %v520, %v778
    %780 = vmatprep.mubr.bf16.mxu0 0
    %781 = vmatmul.mubr.bf16.gmra.mrb[0].mxu0 %v626
    %v782 = vpop.f32.mrb[0].mxu0
    %v783 = vadd.f32 %v516, %v782
    %v784 = vpop.f32.mrb[0].mxu0
    %v785 = vadd.f32 %v520, %v784
    %v786 = vpop.f32.mrb[0].mxu0
    %v787 = vadd.f32 %v516, %v786
    %v788 = vpop.f32.mrb[0].mxu0
    %v789 = vadd.f32 %v520, %v788
    %790 = vmatprep.mubr.bf16.mxu0 0
    %791 = vmatmul.mubr.bf16.gmra.mrb[0].mxu0 %v629
    %v792 = vpop.f32.mrb[0].mxu0
    %v793 = vadd.f32 %v516, %v792
    %v794 = vpop.f32.mrb[0].mxu0
    %v795 = vadd.f32 %v520, %v794
    %v796 = vpop.f32.mrb[0].mxu0
    %v797 = vadd.f32 %v516, %v796
    %v798 = vpop.f32.mrb[0].mxu0
    %v799 = vadd.f32 %v520, %v798
    %800 = vmatprep.mubr.bf16.mxu0 0
    %801 = vmatmul.mubr.bf16.gmra.mrb[0].mxu0 %v632
    %v802 = vpop.f32.mrb[0].mxu0
    %v803 = vadd.f32 %v516, %v802
    %v804 = vpop.f32.mrb[0].mxu0
    %v805 = vadd.f32 %v520, %v804
    %v806 = vpop.f32.mrb[0].mxu0
    %v807 = vadd.f32 %v516, %v806
    %v808 = vpop.f32.mrb[0].mxu0
    %v809 = vadd.f32 %v520, %v808
    %810 = vmatprep.mubr.bf16.mxu0 0
    %811 = vmatmul.mubr.bf16.gmra.mrb[0].mxu0 %v635
    %v812 = vpop.f32.mrb[0].mxu0
    %v813 = vadd.f32 %v516, %v812
    %v814 = vpop.f32.mrb[0].mxu0
    %v815 = vadd.f32 %v520, %v814
    %v816 = vpop.f32.mrb[0].mxu0
    %v817 = vadd.f32 %v516, %v816
    %v818 = vpop.f32.mrb[0].mxu0
    %v819 = vadd.f32 %v520, %v818
    %820 = vmatprep.mubr.bf16.mxu0 0
    %821 = vmatmul.mubr.bf16.gmra.mrb[0].mxu0 %v638
    %v822 = vpop.f32.mrb[0].mxu0
    %v823 = vadd.f32 %v516, %v822
    %v824 = vpop.f32.mrb[0].mxu0
    %v825 = vadd.f32 %v520, %v824
    %v826 = vpop.f32.mrb[0].mxu0
    %v827 = vadd.f32 %v516, %v826
    %v828 = vpop.f32.mrb[0].mxu0
    %v829 = vadd.f32 %v520, %v828
    %830 = vmatprep.mubr.bf16.mxu0 0
    %831 = vmatmul.mubr.bf16.gmra.mrb[0].mxu0 %v641
    %v832 = vpop.f32.mrb[0].mxu0
    %v833 = vadd.f32 %v516, %v832
    %v834 = vpop.f32.mrb[0].mxu0
    %v835 = vadd.f32 %v520, %v834
    %v836 = vpop.f32.mrb[0].mxu0
    %v837 = vadd.f32 %v516, %v836
    %v838 = vpop.f32.mrb[0].mxu0
    %v839 = vadd.f32 %v520, %v838
    %840 = vmatprep.mubr.bf16.mxu0 0
    %841 = vmatmul.mubr.bf16.gmra.mrb[0].mxu0 %v644
    %v842 = vpop.f32.mrb[0].mxu0
    %v843 = vadd.f32 %v516, %v842
    %v844 = vpop.f32.mrb[0].mxu0
    %v845 = vadd.f32 %v520, %v844
    %v846 = vpop.f32.mrb[0].mxu0
    %v847 = vadd.f32 %v516, %v846
    %v848 = vpop.f32.mrb[0].mxu0
    %v849 = vadd.f32 %v520, %v848
    %850 = vmatprep.mubr.bf16.mxu0 0
    %851 = vmatmul.mubr.bf16.gmra.mrb[0].mxu0 %v647
    %v852 = vpop.f32.mrb[0].mxu0
    %v853 = vadd.f32 %v516, %v852
    %v854 = vpop.f32.mrb[0].mxu0
    %v855 = vadd.f32 %v520, %v854
    %v856 = vpop.f32.mrb[0].mxu0
    %v857 = vadd.f32 %v516, %v856
    %v858 = vpop.f32.mrb[0].mxu0
    %v859 = vadd.f32 %v520, %v858
    %860 = vmatprep.mubr.bf16.mxu0 0
    %861 = vmatmul.mubr.bf16.gmra.mrb[0].mxu0 %v650
    %v862 = vpop.f32.mrb[0].mxu0
    %v863 = vadd.f32 %v516, %v862
    %v864 = vpop.f32.mrb[0].mxu0
    %v865 = vadd.f32 %v520, %v864
    %v866 = vpop.f32.mrb[0].mxu0
    %v867 = vadd.f32 %v516, %v866
    %v868 = vpop.f32.mrb[0].mxu0
    %v869 = vadd.f32 %v520, %v868
    %870 = vmatprep.mubr.bf16.mxu0 0
    %871 = vmatmul.mubr.bf16.gmra.mrb[0].mxu0 %v653
    %v872 = vpop.f32.mrb[0].mxu0
    %v873 = vadd.f32 %v516, %v872
    %v874 = vpop.f32.mrb[0].mxu0
    %v875 = vadd.f32 %v520, %v874
    %v876 = vpop.f32.mrb[0].mxu0
    %v877 = vadd.f32 %v516, %v876
    %v878 = vpop.f32.mrb[0].mxu0
    %v879 = vadd.f32 %v520, %v878
    %880 = vmatprep.mubr.bf16.mxu0 0
    %881 = vmatmul.mubr.bf16.gmra.mrb[0].mxu0 %v656
    %v882 = vpop.f32.mrb[0].mxu0
    %v883 = vadd.f32 %v516, %v882
    %v884 = vpop.f32.mrb[0].mxu0
    %v885 = vadd.f32 %v520, %v884
    %v886 = vpop.f32.mrb[0].mxu0
    %v887 = vadd.f32 %v516, %v886
    %v888 = vpop.f32.mrb[0].mxu0
    %v889 = vadd.f32 %v520, %v888
    %890 = vdwg.mxu0
    %891 = vmatprep.subr.bf16.mxu0 0
    %892 = vmatpush1.bf16.msra.mxu0 %v575
    %893 = vmatprep.subr.bf16.mxu0 0
    %894 = vmatpush1.bf16.msra.mxu0 %v578
    %895 = vmatprep.subr.bf16.mxu0 0
    %896 = vmatpush1.bf16.msra.mxu0 %v581
    %897 = vmatprep.subr.bf16.mxu0 0
    %898 = vmatpush1.bf16.msra.mxu0 %v584
    %899 = vmatprep.subr.bf16.mxu0 0
    %900 = vmatpush1.bf16.msra.mxu0 %v666
    %901 = vmatprep.subr.bf16.mxu0 0
    %902 = vmatpush1.bf16.msra.mxu0 0
    %903 = vmatprep.subr.bf16.mxu0 0
    %904 = vmatpush1.bf16.msra.mxu0 0
    %905 = vmatprep.subr.bf16.mxu0 0
    %906 = vmatpush1.bf16.msra.mxu0 0
    %907 = vmatprep.subr.bf16.mxu0 0
    %908 = vmatpush1.bf16.msra.mxu0 0
    %909 = vmatprep.subr.bf16.mxu0 0
    %910 = vmatpush1.bf16.msra.mxu0 0
    %911 = vmatprep.subr.bf16.mxu0 0
    %912 = vmatpush1.bf16.msra.mxu0 0
    %913 = vmatprep.subr.bf16.mxu0 0
    %914 = vmatpush1.bf16.msra.mxu0 0
    %915 = vmatprep.subr.bf16.mxu0 0
    %916 = vmatpush1.bf16.msra.mxu0 0
    %917 = vmatprep.subr.bf16.mxu0 0
    %918 = vmatpush1.bf16.msra.mxu0 0
    %919 = vmatprep.subr.bf16.mxu0 0
    %920 = vmatpush1.bf16.msra.mxu0 0
    %921 = vmatprep.subr.bf16.mxu0 0
    %922 = vmatpush1.bf16.msra.mxu0 0
    %923 = vmatprep.mubr.bf16.mxu0 0
    %924 = vmatmul.mubr.bf16.gmra.mrb[0].mxu0 %v602
    %v925 = vpop.f32.mrb[0].mxu0
    %v926 = vadd.f32 %v524, %v925
    %v927 = vpop.f32.mrb[0].mxu0
    %v928 = vpop.f32.mrb[0].mxu0
    %v929 = vadd.f32 %v524, %v928
    %v930 = vpop.f32.mrb[0].mxu0
    %931 = vmatprep.mubr.bf16.mxu0 0
    %932 = vmatmul.mubr.bf16.gmra.mrb[0].mxu0 %v605
    %v933 = vpop.f32.mrb[0].mxu0
    %v934 = vadd.f32 %v524, %v933
    %v935 = vpop.f32.mrb[0].mxu0
    %v936 = vpop.f32.mrb[0].mxu0
    %v937 = vadd.f32 %v524, %v936
    %v938 = vpop.f32.mrb[0].mxu0
    %939 = vmatprep.mubr.bf16.mxu0 0
    %940 = vmatmul.mubr.bf16.gmra.mrb[0].mxu0 %v608
    %v941 = vpop.f32.mrb[0].mxu0
    %v942 = vadd.f32 %v524, %v941
    %v943 = vpop.f32.mrb[0].mxu0
    %v944 = vpop.f32.mrb[0].mxu0
    %v945 = vadd.f32 %v524, %v944
    %v946 = vpop.f32.mrb[0].mxu0
    %947 = vmatprep.mubr.bf16.mxu0 0
    %948 = vmatmul.mubr.bf16.gmra.mrb[0].mxu0 %v611
    %v949 = vpop.f32.mrb[0].mxu0
    %v950 = vadd.f32 %v524, %v949
    %v951 = vpop.f32.mrb[0].mxu0
    %v952 = vpop.f32.mrb[0].mxu0
    %v953 = vadd.f32 %v524, %v952
    %v954 = vpop.f32.mrb[0].mxu0
    %955 = vmatprep.mubr.bf16.mxu0 0
    %956 = vmatmul.mubr.bf16.gmra.mrb[0].mxu0 %v614
    %v957 = vpop.f32.mrb[0].mxu0
    %v958 = vadd.f32 %v524, %v957
    %v959 = vpop.f32.mrb[0].mxu0
    %v960 = vpop.f32.mrb[0].mxu0
    %v961 = vadd.f32 %v524, %v960
    %v962 = vpop.f32.mrb[0].mxu0
    %963 = vmatprep.mubr.bf16.mxu0 0
    %964 = vmatmul.mubr.bf16.gmra.mrb[0].mxu0 %v617
    %v965 = vpop.f32.mrb[0].mxu0
    %v966 = vadd.f32 %v524, %v965
    %v967 = vpop.f32.mrb[0].mxu0
    %v968 = vpop.f32.mrb[0].mxu0
    %v969 = vadd.f32 %v524, %v968
    %v970 = vpop.f32.mrb[0].mxu0
    %971 = vmatprep.mubr.bf16.mxu0 0
    %972 = vmatmul.mubr.bf16.gmra.mrb[0].mxu0 %v620
    %v973 = vpop.f32.mrb[0].mxu0
    %v974 = vadd.f32 %v524, %v973
    %v975 = vpop.f32.mrb[0].mxu0
    %v976 = vpop.f32.mrb[0].mxu0
    %v977 = vadd.f32 %v524, %v976
    %v978 = vpop.f32.mrb[0].mxu0
    %979 = vmatprep.mubr.bf16.mxu0 0
    %980 = vmatmul.mubr.bf16.gmra.mrb[0].mxu0 %v623
    %v981 = vpop.f32.mrb[0].mxu0
    %v982 = vadd.f32 %v524, %v981
    %v983 = vpop.f32.mrb[0].mxu0
    %v984 = vpop.f32.mrb[0].mxu0
    %v985 = vadd.f32 %v524, %v984
    %v986 = vpop.f32.mrb[0].mxu0
    %987 = vmatprep.mubr.bf16.mxu0 0
    %988 = vmatmul.mubr.bf16.gmra.mrb[0].mxu0 %v626
    %v989 = vpop.f32.mrb[0].mxu0
    %v990 = vadd.f32 %v524, %v989
    %v991 = vpop.f32.mrb[0].mxu0
    %v992 = vpop.f32.mrb[0].mxu0
    %v993 = vadd.f32 %v524, %v992
    %v994 = vpop.f32.mrb[0].mxu0
    %995 = vmatprep.mubr.bf16.mxu0 0
    %996 = vmatmul.mubr.bf16.gmra.mrb[0].mxu0 %v629
    %v997 = vpop.f32.mrb[0].mxu0
    %v998 = vadd.f32 %v524, %v997
    %v999 = vpop.f32.mrb[0].mxu0
    %v1000 = vpop.f32.mrb[0].mxu0
    %v1001 = vadd.f32 %v524, %v1000
    %v1002 = vpop.f32.mrb[0].mxu0
    %1003 = vmatprep.mubr.bf16.mxu0 0
    %1004 = vmatmul.mubr.bf16.gmra.mrb[0].mxu0 %v632
    %v1005 = vpop.f32.mrb[0].mxu0
    %v1006 = vadd.f32 %v524, %v1005
    %v1007 = vpop.f32.mrb[0].mxu0
    %v1008 = vpop.f32.mrb[0].mxu0
    %v1009 = vadd.f32 %v524, %v1008
    %v1010 = vpop.f32.mrb[0].mxu0
    %1011 = vmatprep.mubr.bf16.mxu0 0
    %1012 = vmatmul.mubr.bf16.gmra.mrb[0].mxu0 %v635
    %v1013 = vpop.f32.mrb[0].mxu0
    %v1014 = vadd.f32 %v524, %v1013
    %v1015 = vpop.f32.mrb[0].mxu0
    %v1016 = vpop.f32.mrb[0].mxu0
    %v1017 = vadd.f32 %v524, %v1016
    %v1018 = vpop.f32.mrb[0].mxu0
    %1019 = vmatprep.mubr.bf16.mxu0 0
    %1020 = vmatmul.mubr.bf16.gmra.mrb[0].mxu0 %v638
    %v1021 = vpop.f32.mrb[0].mxu0
    %v1022 = vadd.f32 %v524, %v1021
    %v1023 = vpop.f32.mrb[0].mxu0
    %v1024 = vpop.f32.mrb[0].mxu0
    %v1025 = vadd.f32 %v524, %v1024
    %v1026 = vpop.f32.mrb[0].mxu0
    %1027 = vmatprep.mubr.bf16.mxu0 0
    %1028 = vmatmul.mubr.bf16.gmra.mrb[0].mxu0 %v641
    %v1029 = vpop.f32.mrb[0].mxu0
    %v1030 = vadd.f32 %v524, %v1029
    %v1031 = vpop.f32.mrb[0].mxu0
    %v1032 = vpop.f32.mrb[0].mxu0
    %v1033 = vadd.f32 %v524, %v1032
    %v1034 = vpop.f32.mrb[0].mxu0
    %1035 = vmatprep.mubr.bf16.mxu0 0
    %1036 = vmatmul.mubr.bf16.gmra.mrb[0].mxu0 %v644
    %v1037 = vpop.f32.mrb[0].mxu0
    %v1038 = vadd.f32 %v524, %v1037
    %v1039 = vpop.f32.mrb[0].mxu0
    %v1040 = vpop.f32.mrb[0].mxu0
    %v1041 = vadd.f32 %v524, %v1040
    %v1042 = vpop.f32.mrb[0].mxu0
    %1043 = vmatprep.mubr.bf16.mxu0 0
    %1044 = vmatmul.mubr.bf16.gmra.mrb[0].mxu0 %v647
    %v1045 = vpop.f32.mrb[0].mxu0
    %v1046 = vadd.f32 %v524, %v1045
    %v1047 = vpop.f32.mrb[0].mxu0
    %v1048 = vpop.f32.mrb[0].mxu0
    %v1049 = vadd.f32 %v524, %v1048
    %v1050 = vpop.f32.mrb[0].mxu0
    %1051 = vmatprep.mubr.bf16.mxu0 0
    %1052 = vmatmul.mubr.bf16.gmra.mrb[0].mxu0 %v650
    %v1053 = vpop.f32.mrb[0].mxu0
    %v1054 = vadd.f32 %v524, %v1053
    %v1055 = vpop.f32.mrb[0].mxu0
    %v1056 = vpop.f32.mrb[0].mxu0
    %v1057 = vadd.f32 %v524, %v1056
    %v1058 = vpop.f32.mrb[0].mxu0
    %1059 = vmatprep.mubr.bf16.mxu0 0
    %1060 = vmatmul.mubr.bf16.gmra.mrb[0].mxu0 %v653
    %v1061 = vpop.f32.mrb[0].mxu0
    %v1062 = vadd.f32 %v524, %v1061
    %v1063 = vpop.f32.mrb[0].mxu0
    %v1064 = vpop.f32.mrb[0].mxu0
    %v1065 = vadd.f32 %v524, %v1064
    %v1066 = vpop.f32.mrb[0].mxu0
    %1067 = vmatprep.mubr.bf16.mxu0 0
    %1068 = vmatmul.mubr.bf16.gmra.mrb[0].mxu0 %v656
    %v1069 = vpop.f32.mrb[0].mxu0
    %v1070 = vadd.f32 %v524, %v1069
    %v1071 = vpop.f32.mrb[0].mxu0
    %v1072 = vpop.f32.mrb[0].mxu0
    %v1073 = vadd.f32 %v524, %v1072
    %v1074 = vpop.f32.mrb[0].mxu0
    %1075 = vdwg.mxu0
    %v1076 = vxor.u32 %v703, 2147483648
    %v1077 = vxor.u32 %v707, 2147483648
    %v1078 = vxor.u32 %v713, 2147483648
    %v1079 = vxor.u32 %v717, 2147483648
    %v1080 = vxor.u32 %v723, 2147483648
    %v1081 = vxor.u32 %v727, 2147483648
    %v1082 = vxor.u32 %v733, 2147483648
    %v1083 = vxor.u32 %v737, 2147483648
    %v1084 = vxor.u32 %v743, 2147483648
    %v1085 = vxor.u32 %v747, 2147483648
    %v1086 = vxor.u32 %v753, 2147483648
    %v1087 = vxor.u32 %v757, 2147483648
    %v1088 = vxor.u32 %v763, 2147483648
    %v1089 = vxor.u32 %v767, 2147483648
    %v1090 = vxor.u32 %v773, 2147483648
    %v1091 = vxor.u32 %v777, 2147483648
    %v1092 = vxor.u32 %v783, 2147483648
    %v1093 = vxor.u32 %v787, 2147483648
    %v1094 = vxor.u32 %v793, 2147483648
    %v1095 = vxor.u32 %v797, 2147483648
    %v1096 = vxor.u32 %v803, 2147483648
    %v1097 = vxor.u32 %v807, 2147483648
    %v1098 = vxor.u32 %v813, 2147483648
    %v1099 = vxor.u32 %v817, 2147483648
    %v1100 = vxor.u32 %v823, 2147483648
    %v1101 = vxor.u32 %v827, 2147483648
    %v1102 = vxor.u32 %v833, 2147483648
    %v1103 = vxor.u32 %v837, 2147483648
    %v1104 = vxor.u32 %v843, 2147483648
    %v1105 = vxor.u32 %v847, 2147483648
    %v1106 = vxor.u32 %v853, 2147483648
    %v1107 = vxor.u32 %v857, 2147483648
    %v1108 = vxor.u32 %v863, 2147483648
    %v1109 = vxor.u32 %v867, 2147483648
    %v1110 = vxor.u32 %v873, 2147483648
    %v1111 = vxor.u32 %v877, 2147483648
    %v1112 = vxor.u32 %v883, 2147483648
    %v1113 = vxor.u32 %v887, 2147483648
    %v1114 = vmul.f32 %v1076, 1.442695
    %v1115 = vpow.pop %v1114
    %v1116 = vmul.f32 %v1077, 1.442695
    %v1117 = vpow.pop %v1116
    %v1118 = vmul.f32 %v1078, 1.442695
    %v1119 = vpow.pop %v1118
    %v1120 = vmul.f32 %v1079, 1.442695
    %v1121 = vpow.pop %v1120
    %v1122 = vmul.f32 %v1080, 1.442695
    %v1123 = vpow.pop %v1122
    %v1124 = vmul.f32 %v1081, 1.442695
    %v1125 = vpow.pop %v1124
    %v1126 = vmul.f32 %v1082, 1.442695
    %v1127 = vpow.pop %v1126
    %v1128 = vmul.f32 %v1083, 1.442695
    %v1129 = vpow.pop %v1128
    %v1130 = vmul.f32 %v1084, 1.442695
    %v1131 = vpow.pop %v1130
    %v1132 = vmul.f32 %v1085, 1.442695
    %v1133 = vpow.pop %v1132
    %v1134 = vmul.f32 %v1086, 1.442695
    %v1135 = vpow.pop %v1134
    %v1136 = vmul.f32 %v1087, 1.442695
    %v1137 = vpow.pop %v1136
    %v1138 = vmul.f32 %v1088, 1.442695
    %v1139 = vpow.pop %v1138
    %v1140 = vmul.f32 %v1089, 1.442695
    %v1141 = vpow.pop %v1140
    %v1142 = vmul.f32 %v1090, 1.442695
    %v1143 = vpow.pop %v1142
    %v1144 = vmul.f32 %v1091, 1.442695
    %v1145 = vpow.pop %v1144
    %v1146 = vmul.f32 %v1092, 1.442695
    %v1147 = vpow.pop %v1146
    %v1148 = vmul.f32 %v1093, 1.442695
    %v1149 = vpow.pop %v1148
    %v1150 = vmul.f32 %v1094, 1.442695
    %v1151 = vpow.pop %v1150
    %v1152 = vmul.f32 %v1095, 1.442695
    %v1153 = vpow.pop %v1152
    %v1154 = vmul.f32 %v1096, 1.442695
    %v1155 = vpow.pop %v1154
    %v1156 = vmul.f32 %v1097, 1.442695
    %v1157 = vpow.pop %v1156
    %v1158 = vmul.f32 %v1098, 1.442695
    %v1159 = vpow.pop %v1158
    %v1160 = vmul.f32 %v1099, 1.442695
    %v1161 = vpow.pop %v1160
    %v1162 = vmul.f32 %v1100, 1.442695
    %v1163 = vpow.pop %v1162
    %v1164 = vmul.f32 %v1101, 1.442695
    %v1165 = vpow.pop %v1164
    %v1166 = vmul.f32 %v1102, 1.442695
    %v1167 = vpow.pop %v1166
    %v1168 = vmul.f32 %v1103, 1.442695
    %v1169 = vpow.pop %v1168
    %v1170 = vmul.f32 %v1104, 1.442695
    %v1171 = vpow.pop %v1170
    %v1172 = vmul.f32 %v1105, 1.442695
    %v1173 = vpow.pop %v1172
    %v1174 = vmul.f32 %v1106, 1.442695
    %v1175 = vpow.pop %v1174
    %v1176 = vmul.f32 %v1107, 1.442695
    %v1177 = vpow.pop %v1176
    %v1178 = vmul.f32 %v1108, 1.442695
    %v1179 = vpow.pop %v1178
    %v1180 = vmul.f32 %v1109, 1.442695
    %v1181 = vpow.pop %v1180
    %v1182 = vmul.f32 %v1110, 1.442695
    %v1183 = vpow.pop %v1182
    %v1184 = vmul.f32 %v1111, 1.442695
    %v1185 = vpow.pop %v1184
    %v1186 = vmul.f32 %v1112, 1.442695
    %v1187 = vpow.pop %v1186
    %v1188 = vmul.f32 %v1113, 1.442695
    %v1189 = vpow.pop %v1188
    %v1190 = vadd.f32 %v1115, 1.0
    %v1191 = vadd.f32 %v1117, 1.0
    %v1192 = vadd.f32 %v1119, 1.0
    %v1193 = vadd.f32 %v1121, 1.0
    %v1194 = vadd.f32 %v1123, 1.0
    %v1195 = vadd.f32 %v1125, 1.0
    %v1196 = vadd.f32 %v1127, 1.0
    %v1197 = vadd.f32 %v1129, 1.0
    %v1198 = vadd.f32 %v1131, 1.0
    %v1199 = vadd.f32 %v1133, 1.0
    %v1200 = vadd.f32 %v1135, 1.0
    %v1201 = vadd.f32 %v1137, 1.0
    %v1202 = vadd.f32 %v1139, 1.0
    %v1203 = vadd.f32 %v1141, 1.0
    %v1204 = vadd.f32 %v1143, 1.0
    %v1205 = vadd.f32 %v1145, 1.0
    %v1206 = vadd.f32 %v1147, 1.0
    %v1207 = vadd.f32 %v1149, 1.0
    %v1208 = vadd.f32 %v1151, 1.0
    %v1209 = vadd.f32 %v1153, 1.0
    %v1210 = vadd.f32 %v1155, 1.0
    %v1211 = vadd.f32 %v1157, 1.0
    %v1212 = vadd.f32 %v1159, 1.0
    %v1213 = vadd.f32 %v1161, 1.0
    %v1214 = vadd.f32 %v1163, 1.0
    %v1215 = vadd.f32 %v1165, 1.0
    %v1216 = vadd.f32 %v1167, 1.0
    %v1217 = vadd.f32 %v1169, 1.0
    %v1218 = vadd.f32 %v1171, 1.0
    %v1219 = vadd.f32 %v1173, 1.0
    %v1220 = vadd.f32 %v1175, 1.0
    %v1221 = vadd.f32 %v1177, 1.0
    %v1222 = vadd.f32 %v1179, 1.0
    %v1223 = vadd.f32 %v1181, 1.0
    %v1224 = vadd.f32 %v1183, 1.0
    %v1225 = vadd.f32 %v1185, 1.0
    %v1226 = vadd.f32 %v1187, 1.0
    %v1227 = vadd.f32 %v1189, 1.0
    %v1228 = vrcp.pop %v1190
    %v1229 = vmul.f32 1.0, %v1228
    %v1230 = vrcp.pop %v1191
    %v1231 = vmul.f32 1.0, %v1230
    %v1232 = vrcp.pop %v1192
    %v1233 = vmul.f32 1.0, %v1232
    %v1234 = vrcp.pop %v1193
    %v1235 = vmul.f32 1.0, %v1234
    %v1236 = vrcp.pop %v1194
    %v1237 = vmul.f32 1.0, %v1236
    %v1238 = vrcp.pop %v1195
    %v1239 = vmul.f32 1.0, %v1238
    %v1240 = vrcp.pop %v1196
    %v1241 = vmul.f32 1.0, %v1240
    %v1242 = vrcp.pop %v1197
    %v1243 = vmul.f32 1.0, %v1242
    %v1244 = vrcp.pop %v1198
    %v1245 = vmul.f32 1.0, %v1244
    %v1246 = vrcp.pop %v1199
    %v1247 = vmul.f32 1.0, %v1246
    %v1248 = vrcp.pop %v1200
    %v1249 = vmul.f32 1.0, %v1248
    %v1250 = vrcp.pop %v1201
    %v1251 = vmul.f32 1.0, %v1250
    %v1252 = vrcp.pop %v1202
    %v1253 = vmul.f32 1.0, %v1252
    %v1254 = vrcp.pop %v1203
    %v1255 = vmul.f32 1.0, %v1254
    %v1256 = vrcp.pop %v1204
    %v1257 = vmul.f32 1.0, %v1256
    %v1258 = vrcp.pop %v1205
    %v1259 = vmul.f32 1.0, %v1258
    %v1260 = vrcp.pop %v1206
    %v1261 = vmul.f32 1.0, %v1260
    %v1262 = vrcp.pop %v1207
    %v1263 = vmul.f32 1.0, %v1262
    %v1264 = vrcp.pop %v1208
    %v1265 = vmul.f32 1.0, %v1264
    %v1266 = vrcp.pop %v1209
    %v1267 = vmul.f32 1.0, %v1266
    %v1268 = vrcp.pop %v1210
    %v1269 = vmul.f32 1.0, %v1268
    %v1270 = vrcp.pop %v1211
    %v1271 = vmul.f32 1.0, %v1270
    %v1272 = vrcp.pop %v1212
    %v1273 = vmul.f32 1.0, %v1272
    %v1274 = vrcp.pop %v1213
    %v1275 = vmul.f32 1.0, %v1274
    %v1276 = vrcp.pop %v1214
    %v1277 = vmul.f32 1.0, %v1276
    %v1278 = vrcp.pop %v1215
    %v1279 = vmul.f32 1.0, %v1278
    %v1280 = vrcp.pop %v1216
    %v1281 = vmul.f32 1.0, %v1280
    %v1282 = vrcp.pop %v1217
    %v1283 = vmul.f32 1.0, %v1282
    %v1284 = vrcp.pop %v1218
    %v1285 = vmul.f32 1.0, %v1284
    %v1286 = vrcp.pop %v1219
    %v1287 = vmul.f32 1.0, %v1286
    %v1288 = vrcp.pop %v1220
    %v1289 = vmul.f32 1.0, %v1288
    %v1290 = vrcp.pop %v1221
    %v1291 = vmul.f32 1.0, %v1290
    %v1292 = vrcp.pop %v1222
    %v1293 = vmul.f32 1.0, %v1292
    %v1294 = vrcp.pop %v1223
    %v1295 = vmul.f32 1.0, %v1294
    %v1296 = vrcp.pop %v1224
    %v1297 = vmul.f32 1.0, %v1296
    %v1298 = vrcp.pop %v1225
    %v1299 = vmul.f32 1.0, %v1298
    %v1300 = vrcp.pop %v1226
    %v1301 = vmul.f32 1.0, %v1300
    %v1302 = vrcp.pop %v1227
    %v1303 = vmul.f32 1.0, %v1302
    %v1304 = vtanh.pop %v705
    %v1305 = vtanh.pop %v709
    %v1306 = vtanh.pop %v715
    %v1307 = vtanh.pop %v719
    %v1308 = vtanh.pop %v725
    %v1309 = vtanh.pop %v729
    %v1310 = vtanh.pop %v735
    %v1311 = vtanh.pop %v739
    %v1312 = vtanh.pop %v745
    %v1313 = vtanh.pop %v749
    %v1314 = vtanh.pop %v755
    %v1315 = vtanh.pop %v759
    %v1316 = vtanh.pop %v765
    %v1317 = vtanh.pop %v769
    %v1318 = vtanh.pop %v775
    %v1319 = vtanh.pop %v779
    %v1320 = vtanh.pop %v785
    %v1321 = vtanh.pop %v789
    %v1322 = vtanh.pop %v795
    %v1323 = vtanh.pop %v799
    %v1324 = vtanh.pop %v805
    %v1325 = vtanh.pop %v809
    %v1326 = vtanh.pop %v815
    %v1327 = vtanh.pop %v819
    %v1328 = vtanh.pop %v825
    %v1329 = vtanh.pop %v829
    %v1330 = vtanh.pop %v835
    %v1331 = vtanh.pop %v839
    %v1332 = vtanh.pop %v845
    %v1333 = vtanh.pop %v849
    %v1334 = vtanh.pop %v855
    %v1335 = vtanh.pop %v859
    %v1336 = vtanh.pop %v865
    %v1337 = vtanh.pop %v869
    %v1338 = vtanh.pop %v875
    %v1339 = vtanh.pop %v879
    %v1340 = vtanh.pop %v885
    %v1341 = vtanh.pop %v889
    %v1342 = vxor.u32 %v926, 2147483648
    %v1343 = vxor.u32 %v929, 2147483648
    %v1344 = vxor.u32 %v934, 2147483648
    %v1345 = vxor.u32 %v937, 2147483648
    %v1346 = vxor.u32 %v942, 2147483648
    %v1347 = vxor.u32 %v945, 2147483648
    %v1348 = vxor.u32 %v950, 2147483648
    %v1349 = vxor.u32 %v953, 2147483648
    %v1350 = vxor.u32 %v958, 2147483648
    %v1351 = vxor.u32 %v961, 2147483648
    %v1352 = vxor.u32 %v966, 2147483648
    %v1353 = vxor.u32 %v969, 2147483648
    %v1354 = vxor.u32 %v974, 2147483648
    %v1355 = vxor.u32 %v977, 2147483648
    %v1356 = vxor.u32 %v982, 2147483648
    %v1357 = vxor.u32 %v985, 2147483648
    %v1358 = vxor.u32 %v990, 2147483648
    %v1359 = vxor.u32 %v993, 2147483648
    %v1360 = vxor.u32 %v998, 2147483648
    %v1361 = vxor.u32 %v1001, 2147483648
    %v1362 = vxor.u32 %v1006, 2147483648
    %v1363 = vxor.u32 %v1009, 2147483648
    %v1364 = vxor.u32 %v1014, 2147483648
    %v1365 = vxor.u32 %v1017, 2147483648
    %v1366 = vxor.u32 %v1022, 2147483648
    %v1367 = vxor.u32 %v1025, 2147483648
    %v1368 = vxor.u32 %v1030, 2147483648
    %v1369 = vxor.u32 %v1033, 2147483648
    %v1370 = vxor.u32 %v1038, 2147483648
    %v1371 = vxor.u32 %v1041, 2147483648
    %v1372 = vxor.u32 %v1046, 2147483648
    %v1373 = vxor.u32 %v1049, 2147483648
    %v1374 = vxor.u32 %v1054, 2147483648
    %v1375 = vxor.u32 %v1057, 2147483648
    %v1376 = vxor.u32 %v1062, 2147483648
    %v1377 = vxor.u32 %v1065, 2147483648
    %v1378 = vxor.u32 %v1070, 2147483648
    %v1379 = vxor.u32 %v1073, 2147483648
    %v1380 = vmul.f32 %v1342, 1.442695
    %v1381 = vpow.pop %v1380
    %v1382 = vmul.f32 %v1343, 1.442695
    %v1383 = vpow.pop %v1382
    %v1384 = vmul.f32 %v1344, 1.442695
    %v1385 = vpow.pop %v1384
    %v1386 = vmul.f32 %v1345, 1.442695
    %v1387 = vpow.pop %v1386
    %v1388 = vmul.f32 %v1346, 1.442695
    %v1389 = vpow.pop %v1388
    %v1390 = vmul.f32 %v1347, 1.442695
    %v1391 = vpow.pop %v1390
    %v1392 = vmul.f32 %v1348, 1.442695
    %v1393 = vpow.pop %v1392
    %v1394 = vmul.f32 %v1349, 1.442695
    %v1395 = vpow.pop %v1394
    %v1396 = vmul.f32 %v1350, 1.442695
    %v1397 = vpow.pop %v1396
    %v1398 = vmul.f32 %v1351, 1.442695
    %v1399 = vpow.pop %v1398
    %v1400 = vmul.f32 %v1352, 1.442695
    %v1401 = vpow.pop %v1400
    %v1402 = vmul.f32 %v1353, 1.442695
    %v1403 = vpow.pop %v1402
    %v1404 = vmul.f32 %v1354, 1.442695
    %v1405 = vpow.pop %v1404
    %v1406 = vmul.f32 %v1355, 1.442695
    %v1407 = vpow.pop %v1406
    %v1408 = vmul.f32 %v1356, 1.442695
    %v1409 = vpow.pop %v1408
    %v1410 = vmul.f32 %v1357, 1.442695
    %v1411 = vpow.pop %v1410
    %v1412 = vmul.f32 %v1358, 1.442695
    %v1413 = vpow.pop %v1412
    %v1414 = vmul.f32 %v1359, 1.442695
    %v1415 = vpow.pop %v1414
    %v1416 = vmul.f32 %v1360, 1.442695
    %v1417 = vpow.pop %v1416
    %v1418 = vmul.f32 %v1361, 1.442695
    %v1419 = vpow.pop %v1418
    %v1420 = vmul.f32 %v1362, 1.442695
    %v1421 = vpow.pop %v1420
    %v1422 = vmul.f32 %v1363, 1.442695
    %v1423 = vpow.pop %v1422
    %v1424 = vmul.f32 %v1364, 1.442695
    %v1425 = vpow.pop %v1424
    %v1426 = vmul.f32 %v1365, 1.442695
    %v1427 = vpow.pop %v1426
    %v1428 = vmul.f32 %v1366, 1.442695
    %v1429 = vpow.pop %v1428
    %v1430 = vmul.f32 %v1367, 1.442695
    %v1431 = vpow.pop %v1430
    %v1432 = vmul.f32 %v1368, 1.442695
    %v1433 = vpow.pop %v1432
    %v1434 = vmul.f32 %v1369, 1.442695
    %v1435 = vpow.pop %v1434
    %v1436 = vmul.f32 %v1370, 1.442695
    %v1437 = vpow.pop %v1436
    %v1438 = vmul.f32 %v1371, 1.442695
    %v1439 = vpow.pop %v1438
    %v1440 = vmul.f32 %v1372, 1.442695
    %v1441 = vpow.pop %v1440
    %v1442 = vmul.f32 %v1373, 1.442695
    %v1443 = vpow.pop %v1442
    %v1444 = vmul.f32 %v1374, 1.442695
    %v1445 = vpow.pop %v1444
    %v1446 = vmul.f32 %v1375, 1.442695
    %v1447 = vpow.pop %v1446
    %v1448 = vmul.f32 %v1376, 1.442695
    %v1449 = vpow.pop %v1448
    %v1450 = vmul.f32 %v1377, 1.442695
    %v1451 = vpow.pop %v1450
    %v1452 = vmul.f32 %v1378, 1.442695
    %v1453 = vpow.pop %v1452
    %v1454 = vmul.f32 %v1379, 1.442695
    %v1455 = vpow.pop %v1454
    %v1456 = vadd.f32 %v1381, 1.0
    %v1457 = vadd.f32 %v1383, 1.0
    %v1458 = vadd.f32 %v1385, 1.0
    %v1459 = vadd.f32 %v1387, 1.0
    %v1460 = vadd.f32 %v1389, 1.0
    %v1461 = vadd.f32 %v1391, 1.0
    %v1462 = vadd.f32 %v1393, 1.0
    %v1463 = vadd.f32 %v1395, 1.0
    %v1464 = vadd.f32 %v1397, 1.0
    %v1465 = vadd.f32 %v1399, 1.0
    %v1466 = vadd.f32 %v1401, 1.0
    %v1467 = vadd.f32 %v1403, 1.0
    %v1468 = vadd.f32 %v1405, 1.0
    %v1469 = vadd.f32 %v1407, 1.0
    %v1470 = vadd.f32 %v1409, 1.0
    %v1471 = vadd.f32 %v1411, 1.0
    %v1472 = vadd.f32 %v1413, 1.0
    %v1473 = vadd.f32 %v1415, 1.0
    %v1474 = vadd.f32 %v1417, 1.0
    %v1475 = vadd.f32 %v1419, 1.0
    %v1476 = vadd.f32 %v1421, 1.0
    %v1477 = vadd.f32 %v1423, 1.0
    %v1478 = vadd.f32 %v1425, 1.0
    %v1479 = vadd.f32 %v1427, 1.0
    %v1480 = vadd.f32 %v1429, 1.0
    %v1481 = vadd.f32 %v1431, 1.0
    %v1482 = vadd.f32 %v1433, 1.0
    %v1483 = vadd.f32 %v1435, 1.0
    %v1484 = vadd.f32 %v1437, 1.0
    %v1485 = vadd.f32 %v1439, 1.0
    %v1486 = vadd.f32 %v1441, 1.0
    %v1487 = vadd.f32 %v1443, 1.0
    %v1488 = vadd.f32 %v1445, 1.0
    %v1489 = vadd.f32 %v1447, 1.0
    %v1490 = vadd.f32 %v1449, 1.0
    %v1491 = vadd.f32 %v1451, 1.0
    %v1492 = vadd.f32 %v1453, 1.0
    %v1493 = vadd.f32 %v1455, 1.0
    %v1494 = vrcp.pop %v1456
    %v1495 = vmul.f32 1.0, %v1494
    %v1496 = vrcp.pop %v1457
    %v1497 = vmul.f32 1.0, %v1496
    %v1498 = vrcp.pop %v1458
    %v1499 = vmul.f32 1.0, %v1498
    %v1500 = vrcp.pop %v1459
    %v1501 = vmul.f32 1.0, %v1500
    %v1502 = vrcp.pop %v1460
    %v1503 = vmul.f32 1.0, %v1502
    %v1504 = vrcp.pop %v1461
    %v1505 = vmul.f32 1.0, %v1504
    %v1506 = vrcp.pop %v1462
    %v1507 = vmul.f32 1.0, %v1506
    %v1508 = vrcp.pop %v1463
    %v1509 = vmul.f32 1.0, %v1508
    %v1510 = vrcp.pop %v1464
    %v1511 = vmul.f32 1.0, %v1510
    %v1512 = vrcp.pop %v1465
    %v1513 = vmul.f32 1.0, %v1512
    %v1514 = vrcp.pop %v1466
    %v1515 = vmul.f32 1.0, %v1514
    %v1516 = vrcp.pop %v1467
    %v1517 = vmul.f32 1.0, %v1516
    %v1518 = vrcp.pop %v1468
    %v1519 = vmul.f32 1.0, %v1518
    %v1520 = vrcp.pop %v1469
    %v1521 = vmul.f32 1.0, %v1520
    %v1522 = vrcp.pop %v1470
    %v1523 = vmul.f32 1.0, %v1522
    %v1524 = vrcp.pop %v1471
    %v1525 = vmul.f32 1.0, %v1524
    %v1526 = vrcp.pop %v1472
    %v1527 = vmul.f32 1.0, %v1526
    %v1528 = vrcp.pop %v1473
    %v1529 = vmul.f32 1.0, %v1528
    %v1530 = vrcp.pop %v1474
    %v1531 = vmul.f32 1.0, %v1530
    %v1532 = vrcp.pop %v1475
    %v1533 = vmul.f32 1.0, %v1532
    %v1534 = vrcp.pop %v1476
    %v1535 = vmul.f32 1.0, %v1534
    %v1536 = vrcp.pop %v1477
    %v1537 = vmul.f32 1.0, %v1536
    %v1538 = vrcp.pop %v1478
    %v1539 = vmul.f32 1.0, %v1538
    %v1540 = vrcp.pop %v1479
    %v1541 = vmul.f32 1.0, %v1540
    %v1542 = vrcp.pop %v1480
    %v1543 = vmul.f32 1.0, %v1542
    %v1544 = vrcp.pop %v1481
    %v1545 = vmul.f32 1.0, %v1544
    %v1546 = vrcp.pop %v1482
    %v1547 = vmul.f32 1.0, %v1546
    %v1548 = vrcp.pop %v1483
    %v1549 = vmul.f32 1.0, %v1548
    %v1550 = vrcp.pop %v1484
    %v1551 = vmul.f32 1.0, %v1550
    %v1552 = vrcp.pop %v1485
    %v1553 = vmul.f32 1.0, %v1552
    %v1554 = vrcp.pop %v1486
    %v1555 = vmul.f32 1.0, %v1554
    %v1556 = vrcp.pop %v1487
    %v1557 = vmul.f32 1.0, %v1556
    %v1558 = vrcp.pop %v1488
    %v1559 = vmul.f32 1.0, %v1558
    %v1560 = vrcp.pop %v1489
    %v1561 = vmul.f32 1.0, %v1560
    %v1562 = vrcp.pop %v1490
    %v1563 = vmul.f32 1.0, %v1562
    %v1564 = vrcp.pop %v1491
    %v1565 = vmul.f32 1.0, %v1564
    %v1566 = vrcp.pop %v1492
    %v1567 = vmul.f32 1.0, %v1566
    %v1568 = vrcp.pop %v1493
    %v1569 = vmul.f32 1.0, %v1568
    %v1570 = vmul.f32 %v1229, %v1304
    %v1571 = vmul.f32 %v1231, %v1305
    %v1572 = vmul.f32 %v1233, %v1306
    %v1573 = vmul.f32 %v1235, %v1307
    %v1574 = vmul.f32 %v1237, %v1308
    %v1575 = vmul.f32 %v1239, %v1309
    %v1576 = vmul.f32 %v1241, %v1310
    %v1577 = vmul.f32 %v1243, %v1311
    %v1578 = vmul.f32 %v1245, %v1312
    %v1579 = vmul.f32 %v1247, %v1313
    %v1580 = vmul.f32 %v1249, %v1314
    %v1581 = vmul.f32 %v1251, %v1315
    %v1582 = vmul.f32 %v1253, %v1316
    %v1583 = vmul.f32 %v1255, %v1317
    %v1584 = vmul.f32 %v1257, %v1318
    %v1585 = vmul.f32 %v1259, %v1319
    %v1586 = vmul.f32 %v1261, %v1320
    %v1587 = vmul.f32 %v1263, %v1321
    %v1588 = vmul.f32 %v1265, %v1322
    %v1589 = vmul.f32 %v1267, %v1323
    %v1590 = vmul.f32 %v1269, %v1324
    %v1591 = vmul.f32 %v1271, %v1325
    %v1592 = vmul.f32 %v1273, %v1326
    %v1593 = vmul.f32 %v1275, %v1327
    %v1594 = vmul.f32 %v1277, %v1328
    %v1595 = vmul.f32 %v1279, %v1329
    %v1596 = vmul.f32 %v1281, %v1330
    %v1597 = vmul.f32 %v1283, %v1331
    %v1598 = vmul.f32 %v1285, %v1332
    %v1599 = vmul.f32 %v1287, %v1333
    %v1600 = vmul.f32 %v1289, %v1334
    %v1601 = vmul.f32 %v1291, %v1335
    %v1602 = vmul.f32 %v1293, %v1336
    %v1603 = vmul.f32 %v1295, %v1337
    %v1604 = vmul.f32 %v1297, %v1338
    %v1605 = vmul.f32 %v1299, %v1339
    %v1606 = vmul.f32 %v1301, %v1340
    %v1607 = vmul.f32 %v1303, %v1341
    %v1608 = vtanh.pop %v1570
    %v1609 = vtanh.pop %v1571
    %v1610 = vtanh.pop %v1572
    %v1611 = vtanh.pop %v1573
    %v1612 = vtanh.pop %v1574
    %v1613 = vtanh.pop %v1575
    %v1614 = vtanh.pop %v1576
    %v1615 = vtanh.pop %v1577
    %v1616 = vtanh.pop %v1578
    %v1617 = vtanh.pop %v1579
    %v1618 = vtanh.pop %v1580
    %v1619 = vtanh.pop %v1581
    %v1620 = vtanh.pop %v1582
    %v1621 = vtanh.pop %v1583
    %v1622 = vtanh.pop %v1584
    %v1623 = vtanh.pop %v1585
    %v1624 = vtanh.pop %v1586
    %v1625 = vtanh.pop %v1587
    %v1626 = vtanh.pop %v1588
    %v1627 = vtanh.pop %v1589
    %v1628 = vtanh.pop %v1590
    %v1629 = vtanh.pop %v1591
    %v1630 = vtanh.pop %v1592
    %v1631 = vtanh.pop %v1593
    %v1632 = vtanh.pop %v1594
    %v1633 = vtanh.pop %v1595
    %v1634 = vtanh.pop %v1596
    %v1635 = vtanh.pop %v1597
    %v1636 = vtanh.pop %v1598
    %v1637 = vtanh.pop %v1599
    %v1638 = vtanh.pop %v1600
    %v1639 = vtanh.pop %v1601
    %v1640 = vtanh.pop %v1602
    %v1641 = vtanh.pop %v1603
    %v1642 = vtanh.pop %v1604
    %v1643 = vtanh.pop %v1605
    %v1644 = vtanh.pop %v1606
    %v1645 = vtanh.pop %v1607
    %v1646 = vmul.f32 %v1495, %v1608
    %v1647 = vmul.f32 %v1497, %v1609
    %v1648 = vmul.f32 %v1499, %v1610
    %v1649 = vmul.f32 %v1501, %v1611
    %v1650 = vmul.f32 %v1503, %v1612
    %v1651 = vmul.f32 %v1505, %v1613
    %v1652 = vmul.f32 %v1507, %v1614
    %v1653 = vmul.f32 %v1509, %v1615
    %v1654 = vmul.f32 %v1511, %v1616
    %v1655 = vmul.f32 %v1513, %v1617
    %v1656 = vmul.f32 %v1515, %v1618
    %v1657 = vmul.f32 %v1517, %v1619
    %v1658 = vmul.f32 %v1519, %v1620
    %v1659 = vmul.f32 %v1521, %v1621
    %v1660 = vmul.f32 %v1523, %v1622
    %v1661 = vmul.f32 %v1525, %v1623
    %v1662 = vmul.f32 %v1527, %v1624
    %v1663 = vmul.f32 %v1529, %v1625
    %v1664 = vmul.f32 %v1531, %v1626
    %v1665 = vmul.f32 %v1533, %v1627
    %v1666 = vmul.f32 %v1535, %v1628
    %v1667 = vmul.f32 %v1537, %v1629
    %v1668 = vmul.f32 %v1539, %v1630
    %v1669 = vmul.f32 %v1541, %v1631
    %v1670 = vmul.f32 %v1543, %v1632
    %v1671 = vmul.f32 %v1545, %v1633
    %v1672 = vmul.f32 %v1547, %v1634
    %v1673 = vmul.f32 %v1549, %v1635
    %v1674 = vmul.f32 %v1551, %v1636
    %v1675 = vmul.f32 %v1553, %v1637
    %v1676 = vmul.f32 %v1555, %v1638
    %v1677 = vmul.f32 %v1557, %v1639
    %v1678 = vmul.f32 %v1559, %v1640
    %v1679 = vmul.f32 %v1561, %v1641
    %v1680 = vmul.f32 %v1563, %v1642
    %v1681 = vmul.f32 %v1565, %v1643
    %v1682 = vmul.f32 %v1567, %v1644
    %v1683 = vmul.f32 %v1569, %v1645
    %1684 = vst [vmem:[#allocation2] sm:$0xff] %v1646
    %1685 = vst [vmem:[#allocation2 + $0x10] sm:$0xff] %v1647
    %1686 = vst [vmem:[#allocation2 + $0x20] sm:$0xff] %v1648
    %1687 = vst [vmem:[#allocation2 + $0x30] sm:$0xff] %v1649
    %1688 = vst [vmem:[#allocation2 + $0x40] sm:$0xff] %v1650
    %1689 = vst [vmem:[#allocation2 + $0x50] sm:$0xff] %v1651
    %1690 = vst [vmem:[#allocation2 + $0x60] sm:$0xff] %v1652
    %1691 = vst [vmem:[#allocation2 + $0x70] sm:$0xff] %v1653
    %1692 = vst [vmem:[#allocation2 + $0x80] sm:$0xff] %v1654
    %1693 = vst [vmem:[#allocation2 + $0x90] sm:$0xff] %v1655
    %1694 = vst [vmem:[#allocation2 + $0xa0] sm:$0xff] %v1656
    %1695 = vst [vmem:[#allocation2 + $0xb0] sm:$0xff] %v1657
    %1696 = vst [vmem:[#allocation2 + $0xc0] sm:$0xff] %v1658
    %1697 = vst [vmem:[#allocation2 + $0xd0] sm:$0xff] %v1659
    %1698 = vst [vmem:[#allocation2 + $0xe0] sm:$0xff] %v1660
    %1699 = vst [vmem:[#allocation2 + $0xf0] sm:$0xff] %v1661
    %1700 = vst [vmem:[#allocation2 + $0x100] sm:$0xff] %v1662
    %1701 = vst [vmem:[#allocation2 + $0x110] sm:$0xff] %v1663
    %1702 = vst [vmem:[#allocation2 + $0x120] sm:$0xff] %v1664
    %1703 = vst [vmem:[#allocation2 + $0x130] sm:$0xff] %v1665
    %1704 = vst [vmem:[#allocation2 + $0x140] sm:$0xff] %v1666
    %1705 = vst [vmem:[#allocation2 + $0x150] sm:$0xff] %v1667
    %1706 = vst [vmem:[#allocation2 + $0x160] sm:$0xff] %v1668
    %1707 = vst [vmem:[#allocation2 + $0x170] sm:$0xff] %v1669
    %1708 = vst [vmem:[#allocation2 + $0x180] sm:$0xff] %v1670
    %1709 = vst [vmem:[#allocation2 + $0x190] sm:$0xff] %v1671
    %1710 = vst [vmem:[#allocation2 + $0x1a0] sm:$0xff] %v1672
    %1711 = vst [vmem:[#allocation2 + $0x1b0] sm:$0xff] %v1673
    %1712 = vst [vmem:[#allocation2 + $0x1c0] sm:$0xff] %v1674
    %1713 = vst [vmem:[#allocation2 + $0x1d0] sm:$0xff] %v1675
    %1714 = vst [vmem:[#allocation2 + $0x1e0] sm:$0xff] %v1676
    %1715 = vst [vmem:[#allocation2 + $0x1f0] sm:$0xff] %v1677
    %1716 = vst [vmem:[#allocation2 + $0x200] sm:$0xff] %v1678
    %1717 = vst [vmem:[#allocation2 + $0x210] sm:$0xff] %v1679
    %1718 = vst [vmem:[#allocation2 + $0x220] sm:$0xff] %v1680
    %1719 = vst [vmem:[#allocation2 + $0x230] sm:$0xff] %v1681
    %1720 = vst [vmem:[#allocation2 + $0x240] sm:$0xff] %v1682
    %1721 = vst [vmem:[#allocation2 + $0x250] sm:$0xf] %v1683
    %v1722 = vld [vmem:[%s1 + $0xc] sm:$0xff]
    %v1723 = vld [vmem:[%s1 + $0x14] sm:$0xf]
    %v1724 = vld [vmem:[%s1 + $0x24] sm:$0xff]
    %v1725 = vld [vmem:[%s1 + $0x2c] sm:$0xf]
    %v1726 = vld [vmem:[%s1 + $0x3c] sm:$0xff]
    %v1727 = vld [vmem:[%s1 + $0x44] sm:$0xf]
    %v1728 = vld [vmem:[%s1 + $0x54] sm:$0xff]
    %v1729 = vld [vmem:[%s1 + $0x5c] sm:$0xf]
    %v1730 = vld [vmem:[%s1 + $0x6c] sm:$0xff]
    %v1731 = vld [vmem:[%s1 + $0x74] sm:$0xf]
    %v1732 = vld [vmem:[%s1 + $0x84] sm:$0xff]
    %v1733 = vld [vmem:[%s1 + $0x8c] sm:$0xf]
    %v1734 = vld [vmem:[%s1 + $0x9c] sm:$0xff]
    %v1735 = vld [vmem:[%s1 + $0xa4] sm:$0xf]
    %v1736 = vld [vmem:[%s1 + $0xb4] sm:$0xff]
    %v1737 = vld [vmem:[%s1 + $0xbc] sm:$0xf]
    %v1738 = vld [vmem:[%s1 + $0xcc] sm:$0x77]
    %v1739 = vld [vmem:[%s1 + $0xd4] sm:$0x7]
    %v1740 = vld [vmem:[%s2 + $0x3] sm:$0x7]
    %v1742 = vlaneseq
    %v1743 = vshrl.u32 %v1742, 7
    %v1744 = vsub.s32 0, %v1743
    %v1745 = vrot.slane %v1740, %v1744
    %v1746 = vlaneseq
    %v1747 = vshrl.u32 %v1746, 7
    %v1748 = vsub.s32 1, %v1747
    %v1749 = vrot.slane %v1740, %v1748
    %v1750 = vlaneseq
    %v1751 = vshrl.u32 %v1750, 7
    %v1752 = vsub.s32 2, %v1751
    %v1753 = vrot.slane %v1740, %v1752
    %v1775 = vunpack.c.l.b16 %v1722
    %v1776 = vunpack.c.h.b16 %v1722
    %v1777 = vunpack.c.l.b16 %v1723
    %v1778 = vunpack.c.l.b16 %v1724
    %v1779 = vunpack.c.h.b16 %v1724
    %v1780 = vunpack.c.l.b16 %v1725
    %v1781 = vunpack.c.l.b16 %v1726
    %v1782 = vunpack.c.h.b16 %v1726
    %v1783 = vunpack.c.l.b16 %v1727
    %v1784 = vunpack.c.l.b16 %v1728
    %v1785 = vunpack.c.h.b16 %v1728
    %v1786 = vunpack.c.l.b16 %v1729
    %v1787 = vunpack.c.l.b16 %v1730
    %v1788 = vunpack.c.h.b16 %v1730
    %v1789 = vunpack.c.l.b16 %v1731
    %v1790 = vunpack.c.l.b16 %v1732
    %v1791 = vunpack.c.h.b16 %v1732
    %v1792 = vunpack.c.l.b16 %v1733
    %v1793 = vunpack.c.l.b16 %v1734
    %v1794 = vunpack.c.h.b16 %v1734
    %v1795 = vunpack.c.l.b16 %v1735
    %v1796 = vunpack.c.l.b16 %v1736
    %v1797 = vunpack.c.h.b16 %v1736
    %v1798 = vunpack.c.l.b16 %v1737
    %v1799 = vunpack.c.l.b16 %v1738
    %v1800 = vunpack.c.h.b16 %v1738
    %v1801 = vunpack.c.l.b16 %v1739
    %v1802 = vpack.c.b16 %v1778, %v1775
    %v1803 = vpack.c.b16 %v1779, %v1776
    %v1804 = vpack.c.b16 %v1780, %v1777
    %v1805 = vpack.c.b16 %v1784, %v1781
    %v1806 = vpack.c.b16 %v1785, %v1782
    %v1807 = vpack.c.b16 %v1786, %v1783
    %v1808 = vpack.c.b16 %v1790, %v1787
    %v1809 = vpack.c.b16 %v1791, %v1788
    %v1810 = vpack.c.b16 %v1792, %v1789
    %v1811 = vpack.c.b16 %v1796, %v1793
    %v1812 = vpack.c.b16 %v1797, %v1794
    %v1813 = vpack.c.b16 %v1798, %v1795
    %v1814 = vpack.c.b16 %v1799, %v1799
    %v1815 = vpack.c.b16 %v1800, %v1800
    %v1816 = vpack.c.b16 %v1801, %v1801
    %v1830 = vsel %vm658, %v1814, 0
    %v1833 = vsel %vm658, %v1815, 0
    %v1836 = vsel %vm658, %v1816, 0
    %1838 = vmatprep.subr.bf16.mxu0 %v1803
    %1839 = vmatpush1.bf16.msra.mxu0 %v1802
    %1840 = vmatprep.subr.bf16.mxu0 %v1806
    %1841 = vmatpush1.bf16.msra.mxu0 %v1805
    %1842 = vmatprep.subr.bf16.mxu0 %v1809
    %1843 = vmatpush1.bf16.msra.mxu0 %v1808
    %1844 = vmatprep.subr.bf16.mxu0 %v1812
    %1845 = vmatpush1.bf16.msra.mxu0 %v1811
    %1846 = vmatprep.subr.bf16.mxu0 %v1833
    %1847 = vmatpush1.bf16.msra.mxu0 %v1830
    %1848 = vmatprep.subr.bf16.mxu0 0
    %1849 = vmatpush1.bf16.msra.mxu0 0
    %1850 = vmatprep.subr.bf16.mxu0 0
    %1851 = vmatpush1.bf16.msra.mxu0 0
    %1852 = vmatprep.subr.bf16.mxu0 0
    %1853 = vmatpush1.bf16.msra.mxu0 0
    %1854 = vmatprep.subr.bf16.mxu0 0
    %1855 = vmatpush1.bf16.msra.mxu0 0
    %1856 = vmatprep.subr.bf16.mxu0 0
    %1857 = vmatpush1.bf16.msra.mxu0 0
    %1858 = vmatprep.subr.bf16.mxu0 0
    %1859 = vmatpush1.bf16.msra.mxu0 0
    %1860 = vmatprep.subr.bf16.mxu0 0
    %1861 = vmatpush1.bf16.msra.mxu0 0
    %1862 = vmatprep.subr.bf16.mxu0 0
    %1863 = vmatpush1.bf16.msra.mxu0 0
    %1864 = vmatprep.subr.bf16.mxu0 0
    %1865 = vmatpush1.bf16.msra.mxu0 0
    %1866 = vmatprep.subr.bf16.mxu0 0
    %1867 = vmatpush1.bf16.msra.mxu0 0
    %1868 = vmatprep.subr.bf16.mxu0 0
    %1869 = vmatpush1.bf16.msra.mxu0 0
    %1870 = vmatprep.mubr.bf16.mxu0 0
    %1871 = vmatmul.mubr.bf16.gmra.mrb[0].mxu0 %v602
    %v1872 = vpop.f32.mrb[0].mxu0
    %v1873 = vadd.f32 %v1745, %v1872
    %v1874 = vpop.f32.mrb[0].mxu0
    %v1875 = vadd.f32 %v1749, %v1874
    %v1876 = vpop.f32.mrb[0].mxu0
    %v1877 = vadd.f32 %v1745, %v1876
    %v1878 = vpop.f32.mrb[0].mxu0
    %v1879 = vadd.f32 %v1749, %v1878
    %1880 = vmatprep.mubr.bf16.mxu0 0
    %1881 = vmatmul.mubr.bf16.gmra.mrb[0].mxu0 %v605
    %v1882 = vpop.f32.mrb[0].mxu0
    %v1883 = vadd.f32 %v1745, %v1882
    %v1884 = vpop.f32.mrb[0].mxu0
    %v1885 = vadd.f32 %v1749, %v1884
    %v1886 = vpop.f32.mrb[0].mxu0
    %v1887 = vadd.f32 %v1745, %v1886
    %v1888 = vpop.f32.mrb[0].mxu0
    %v1889 = vadd.f32 %v1749, %v1888
    %1890 = vmatprep.mubr.bf16.mxu0 0
    %1891 = vmatmul.mubr.bf16.gmra.mrb[0].mxu0 %v608
    %v1892 = vpop.f32.mrb[0].mxu0
    %v1893 = vadd.f32 %v1745, %v1892
    %v1894 = vpop.f32.mrb[0].mxu0
    %v1895 = vadd.f32 %v1749, %v1894
    %v1896 = vpop.f32.mrb[0].mxu0
    %v1897 = vadd.f32 %v1745, %v1896
    %v1898 = vpop.f32.mrb[0].mxu0
    %v1899 = vadd.f32 %v1749, %v1898
    %1900 = vmatprep.mubr.bf16.mxu0 0
    %1901 = vmatmul.mubr.bf16.gmra.mrb[0].mxu0 %v611
    %v1902 = vpop.f32.mrb[0].mxu0
    %v1903 = vadd.f32 %v1745, %v1902
    %v1904 = vpop.f32.mrb[0].mxu0
    %v1905 = vadd.f32 %v1749, %v1904
    %v1906 = vpop.f32.mrb[0].mxu0
    %v1907 = vadd.f32 %v1745, %v1906
    %v1908 = vpop.f32.mrb[0].mxu0
    %v1909 = vadd.f32 %v1749, %v1908
    %1910 = vmatprep.mubr.bf16.mxu0 0
    %1911 = vmatmul.mubr.bf16.gmra.mrb[0].mxu0 %v614
    %v1912 = vpop.f32.mrb[0].mxu0
    %v1913 = vadd.f32 %v1745, %v1912
    %v1914 = vpop.f32.mrb[0].mxu0
    %v1915 = vadd.f32 %v1749, %v1914
    %v1916 = vpop.f32.mrb[0].mxu0
    %v1917 = vadd.f32 %v1745, %v1916
    %v1918 = vpop.f32.mrb[0].mxu0
    %v1919 = vadd.f32 %v1749, %v1918
    %1920 = vmatprep.mubr.bf16.mxu0 0
    %1921 = vmatmul.mubr.bf16.gmra.mrb[0].mxu0 %v617
    %v1922 = vpop.f32.mrb[0].mxu0
    %v1923 = vadd.f32 %v1745, %v1922
    %v1924 = vpop.f32.mrb[0].mxu0
    %v1925 = vadd.f32 %v1749, %v1924
    %v1926 = vpop.f32.mrb[0].mxu0
    %v1927 = vadd.f32 %v1745, %v1926
    %v1928 = vpop.f32.mrb[0].mxu0
    %v1929 = vadd.f32 %v1749, %v1928
    %1930 = vmatprep.mubr.bf16.mxu0 0
    %1931 = vmatmul.mubr.bf16.gmra.mrb[0].mxu0 %v620
    %v1932 = vpop.f32.mrb[0].mxu0
    %v1933 = vadd.f32 %v1745, %v1932
    %v1934 = vpop.f32.mrb[0].mxu0
    %v1935 = vadd.f32 %v1749, %v1934
    %v1936 = vpop.f32.mrb[0].mxu0
    %v1937 = vadd.f32 %v1745, %v1936
    %v1938 = vpop.f32.mrb[0].mxu0
    %v1939 = vadd.f32 %v1749, %v1938
    %1940 = vmatprep.mubr.bf16.mxu0 0
    %1941 = vmatmul.mubr.bf16.gmra.mrb[0].mxu0 %v623
    %v1942 = vpop.f32.mrb[0].mxu0
    %v1943 = vadd.f32 %v1745, %v1942
    %v1944 = vpop.f32.mrb[0].mxu0
    %v1945 = vadd.f32 %v1749, %v1944
    %v1946 = vpop.f32.mrb[0].mxu0
    %v1947 = vadd.f32 %v1745, %v1946
    %v1948 = vpop.f32.mrb[0].mxu0
    %v1949 = vadd.f32 %v1749, %v1948
    %1950 = vmatprep.mubr.bf16.mxu0 0
    %1951 = vmatmul.mubr.bf16.gmra.mrb[0].mxu0 %v626
    %v1952 = vpop.f32.mrb[0].mxu0
    %v1953 = vadd.f32 %v1745, %v1952
    %v1954 = vpop.f32.mrb[0].mxu0
    %v1955 = vadd.f32 %v1749, %v1954
    %v1956 = vpop.f32.mrb[0].mxu0
    %v1957 = vadd.f32 %v1745, %v1956
    %v1958 = vpop.f32.mrb[0].mxu0
    %v1959 = vadd.f32 %v1749, %v1958
    %1960 = vmatprep.mubr.bf16.mxu0 0
    %1961 = vmatmul.mubr.bf16.gmra.mrb[0].mxu0 %v629
    %v1962 = vpop.f32.mrb[0].mxu0
    %v1963 = vadd.f32 %v1745, %v1962
    %v1964 = vpop.f32.mrb[0].mxu0
    %v1965 = vadd.f32 %v1749, %v1964
    %v1966 = vpop.f32.mrb[0].mxu0
    %v1967 = vadd.f32 %v1745, %v1966
    %v1968 = vpop.f32.mrb[0].mxu0
    %v1969 = vadd.f32 %v1749, %v1968
    %1970 = vmatprep.mubr.bf16.mxu0 0
    %1971 = vmatmul.mubr.bf16.gmra.mrb[0].mxu0 %v632
    %v1972 = vpop.f32.mrb[0].mxu0
    %v1973 = vadd.f32 %v1745, %v1972
    %v1974 = vpop.f32.mrb[0].mxu0
    %v1975 = vadd.f32 %v1749, %v1974
    %v1976 = vpop.f32.mrb[0].mxu0
    %v1977 = vadd.f32 %v1745, %v1976
    %v1978 = vpop.f32.mrb[0].mxu0
    %v1979 = vadd.f32 %v1749, %v1978
    %1980 = vmatprep.mubr.bf16.mxu0 0
    %1981 = vmatmul.mubr.bf16.gmra.mrb[0].mxu0 %v635
    %v1982 = vpop.f32.mrb[0].mxu0
    %v1983 = vadd.f32 %v1745, %v1982
    %v1984 = vpop.f32.mrb[0].mxu0
    %v1985 = vadd.f32 %v1749, %v1984
    %v1986 = vpop.f32.mrb[0].mxu0
    %v1987 = vadd.f32 %v1745, %v1986
    %v1988 = vpop.f32.mrb[0].mxu0
    %v1989 = vadd.f32 %v1749, %v1988
    %1990 = vmatprep.mubr.bf16.mxu0 0
    %1991 = vmatmul.mubr.bf16.gmra.mrb[0].mxu0 %v638
    %v1992 = vpop.f32.mrb[0].mxu0
    %v1993 = vadd.f32 %v1745, %v1992
    %v1994 = vpop.f32.mrb[0].mxu0
    %v1995 = vadd.f32 %v1749, %v1994
    %v1996 = vpop.f32.mrb[0].mxu0
    %v1997 = vadd.f32 %v1745, %v1996
    %v1998 = vpop.f32.mrb[0].mxu0
    %v1999 = vadd.f32 %v1749, %v1998
    %2000 = vmatprep.mubr.bf16.mxu0 0
    %2001 = vmatmul.mubr.bf16.gmra.mrb[0].mxu0 %v641
    %v2002 = vpop.f32.mrb[0].mxu0
    %v2003 = vadd.f32 %v1745, %v2002
    %v2004 = vpop.f32.mrb[0].mxu0
    %v2005 = vadd.f32 %v1749, %v2004
    %v2006 = vpop.f32.mrb[0].mxu0
    %v2007 = vadd.f32 %v1745, %v2006
    %v2008 = vpop.f32.mrb[0].mxu0
    %v2009 = vadd.f32 %v1749, %v2008
    %2010 = vmatprep.mubr.bf16.mxu0 0
    %2011 = vmatmul.mubr.bf16.gmra.mrb[0].mxu0 %v644
    %v2012 = vpop.f32.mrb[0].mxu0
    %v2013 = vadd.f32 %v1745, %v2012
    %v2014 = vpop.f32.mrb[0].mxu0
    %v2015 = vadd.f32 %v1749, %v2014
    %v2016 = vpop.f32.mrb[0].mxu0
    %v2017 = vadd.f32 %v1745, %v2016
    %v2018 = vpop.f32.mrb[0].mxu0
    %v2019 = vadd.f32 %v1749, %v2018
    %2020 = vmatprep.mubr.bf16.mxu0 0
    %2021 = vmatmul.mubr.bf16.gmra.mrb[0].mxu0 %v647
    %v2022 = vpop.f32.mrb[0].mxu0
    %v2023 = vadd.f32 %v1745, %v2022
    %v2024 = vpop.f32.mrb[0].mxu0
    %v2025 = vadd.f32 %v1749, %v2024
    %v2026 = vpop.f32.mrb[0].mxu0
    %v2027 = vadd.f32 %v1745, %v2026
    %v2028 = vpop.f32.mrb[0].mxu0
    %v2029 = vadd.f32 %v1749, %v2028
    %2030 = vmatprep.mubr.bf16.mxu0 0
    %2031 = vmatmul.mubr.bf16.gmra.mrb[0].mxu0 %v650
    %v2032 = vpop.f32.mrb[0].mxu0
    %v2033 = vadd.f32 %v1745, %v2032
    %v2034 = vpop.f32.mrb[0].mxu0
    %v2035 = vadd.f32 %v1749, %v2034
    %v2036 = vpop.f32.mrb[0].mxu0
    %v2037 = vadd.f32 %v1745, %v2036
    %v2038 = vpop.f32.mrb[0].mxu0
    %v2039 = vadd.f32 %v1749, %v2038
    %2040 = vmatprep.mubr.bf16.mxu0 0
    %2041 = vmatmul.mubr.bf16.gmra.mrb[0].mxu0 %v653
    %v2042 = vpop.f32.mrb[0].mxu0
    %v2043 = vadd.f32 %v1745, %v2042
    %v2044 = vpop.f32.mrb[0].mxu0
    %v2045 = vadd.f32 %v1749, %v2044
    %v2046 = vpop.f32.mrb[0].mxu0
    %v2047 = vadd.f32 %v1745, %v2046
    %v2048 = vpop.f32.mrb[0].mxu0
    %v2049 = vadd.f32 %v1749, %v2048
    %2050 = vmatprep.mubr.bf16.mxu0 0
    %2051 = vmatmul.mubr.bf16.gmra.mrb[0].mxu0 %v656
    %v2052 = vpop.f32.mrb[0].mxu0
    %v2053 = vadd.f32 %v1745, %v2052
    %v2054 = vpop.f32.mrb[0].mxu0
    %v2055 = vadd.f32 %v1749, %v2054
    %v2056 = vpop.f32.mrb[0].mxu0
    %v2057 = vadd.f32 %v1745, %v2056
    %v2058 = vpop.f32.mrb[0].mxu0
    %v2059 = vadd.f32 %v1749, %v2058
    %2060 = vdwg.mxu0
    %2061 = vmatprep.subr.bf16.mxu0 0
    %2062 = vmatpush1.bf16.msra.mxu0 %v1804
    %2063 = vmatprep.subr.bf16.mxu0 0
    %2064 = vmatpush1.bf16.msra.mxu0 %v1807
    %2065 = vmatprep.subr.bf16.mxu0 0
    %2066 = vmatpush1.bf16.msra.mxu0 %v1810
    %2067 = vmatprep.subr.bf16.mxu0 0
    %2068 = vmatpush1.bf16.msra.mxu0 %v1813
    %2069 = vmatprep.subr.bf16.mxu0 0
    %2070 = vmatpush1.bf16.msra.mxu0 %v1836
    %2071 = vmatprep.subr.bf16.mxu0 0
    %2072 = vmatpush1.bf16.msra.mxu0 0
    %2073 = vmatprep.subr.bf16.mxu0 0
    %2074 = vmatpush1.bf16.msra.mxu0 0
    %2075 = vmatprep.subr.bf16.mxu0 0
    %2076 = vmatpush1.bf16.msra.mxu0 0
    %2077 = vmatprep.subr.bf16.mxu0 0
    %2078 = vmatpush1.bf16.msra.mxu0 0
    %2079 = vmatprep.subr.bf16.mxu0 0
    %2080 = vmatpush1.bf16.msra.mxu0 0
    %2081 = vmatprep.subr.bf16.mxu0 0
    %2082 = vmatpush1.bf16.msra.mxu0 0
    %2083 = vmatprep.subr.bf16.mxu0 0
    %2084 = vmatpush1.bf16.msra.mxu0 0
    %2085 = vmatprep.subr.bf16.mxu0 0
    %2086 = vmatpush1.bf16.msra.mxu0 0
    %2087 = vmatprep.subr.bf16.mxu0 0
    %2088 = vmatpush1.bf16.msra.mxu0 0
    %2089 = vmatprep.subr.bf16.mxu0 0
    %2090 = vmatpush1.bf16.msra.mxu0 0
    %2091 = vmatprep.subr.bf16.mxu0 0
    %2092 = vmatpush1.bf16.msra.mxu0 0
    %2093 = vmatprep.mubr.bf16.mxu0 0
    %2094 = vmatmul.mubr.bf16.gmra.mrb[0].mxu0 %v602
    %v2095 = vpop.f32.mrb[0].mxu0
    %v2096 = vadd.f32 %v1753, %v2095
    %v2097 = vpop.f32.mrb[0].mxu0
    %v2098 = vpop.f32.mrb[0].mxu0
    %v2099 = vadd.f32 %v1753, %v2098
    %v2100 = vpop.f32.mrb[0].mxu0
    %2101 = vmatprep.mubr.bf16.mxu0 0
    %2102 = vmatmul.mubr.bf16.gmra.mrb[0].mxu0 %v605
    %v2103 = vpop.f32.mrb[0].mxu0
    %v2104 = vadd.f32 %v1753, %v2103
    %v2105 = vpop.f32.mrb[0].mxu0
    %v2106 = vpop.f32.mrb[0].mxu0
    %v2107 = vadd.f32 %v1753, %v2106
    %v2108 = vpop.f32.mrb[0].mxu0
    %2109 = vmatprep.mubr.bf16.mxu0 0
    %2110 = vmatmul.mubr.bf16.gmra.mrb[0].mxu0 %v608
    %v2111 = vpop.f32.mrb[0].mxu0
    %v2112 = vadd.f32 %v1753, %v2111
    %v2113 = vpop.f32.mrb[0].mxu0
    %v2114 = vpop.f32.mrb[0].mxu0
    %v2115 = vadd.f32 %v1753, %v2114
    %v2116 = vpop.f32.mrb[0].mxu0
    %2117 = vmatprep.mubr.bf16.mxu0 0
    %2118 = vmatmul.mubr.bf16.gmra.mrb[0].mxu0 %v611
    %v2119 = vpop.f32.mrb[0].mxu0
    %v2120 = vadd.f32 %v1753, %v2119
    %v2121 = vpop.f32.mrb[0].mxu0
    %v2122 = vpop.f32.mrb[0].mxu0
    %v2123 = vadd.f32 %v1753, %v2122
    %v2124 = vpop.f32.mrb[0].mxu0
    %2125 = vmatprep.mubr.bf16.mxu0 0
    %2126 = vmatmul.mubr.bf16.gmra.mrb[0].mxu0 %v614
    %v2127 = vpop.f32.mrb[0].mxu0
    %v2128 = vadd.f32 %v1753, %v2127
    %v2129 = vpop.f32.mrb[0].mxu0
    %v2130 = vpop.f32.mrb[0].mxu0
    %v2131 = vadd.f32 %v1753, %v2130
    %v2132 = vpop.f32.mrb[0].mxu0
    %2133 = vmatprep.mubr.bf16.mxu0 0
    %2134 = vmatmul.mubr.bf16.gmra.mrb[0].mxu0 %v617
    %v2135 = vpop.f32.mrb[0].mxu0
    %v2136 = vadd.f32 %v1753, %v2135
    %v2137 = vpop.f32.mrb[0].mxu0
    %v2138 = vpop.f32.mrb[0].mxu0
    %v2139 = vadd.f32 %v1753, %v2138
    %v2140 = vpop.f32.mrb[0].mxu0
    %2141 = vmatprep.mubr.bf16.mxu0 0
    %2142 = vmatmul.mubr.bf16.gmra.mrb[0].mxu0 %v620
    %v2143 = vpop.f32.mrb[0].mxu0
    %v2144 = vadd.f32 %v1753, %v2143
    %v2145 = vpop.f32.mrb[0].mxu0
    %v2146 = vpop.f32.mrb[0].mxu0
    %v2147 = vadd.f32 %v1753, %v2146
    %v2148 = vpop.f32.mrb[0].mxu0
    %2149 = vmatprep.mubr.bf16.mxu0 0
    %2150 = vmatmul.mubr.bf16.gmra.mrb[0].mxu0 %v623
    %v2151 = vpop.f32.mrb[0].mxu0
    %v2152 = vadd.f32 %v1753, %v2151
    %v2153 = vpop.f32.mrb[0].mxu0
    %v2154 = vpop.f32.mrb[0].mxu0
    %v2155 = vadd.f32 %v1753, %v2154
    %v2156 = vpop.f32.mrb[0].mxu0
    %2157 = vmatprep.mubr.bf16.mxu0 0
    %2158 = vmatmul.mubr.bf16.gmra.mrb[0].mxu0 %v626
    %v2159 = vpop.f32.mrb[0].mxu0
    %v2160 = vadd.f32 %v1753, %v2159
    %v2161 = vpop.f32.mrb[0].mxu0
    %v2162 = vpop.f32.mrb[0].mxu0
    %v2163 = vadd.f32 %v1753, %v2162
    %v2164 = vpop.f32.mrb[0].mxu0
    %2165 = vmatprep.mubr.bf16.mxu0 0
    %2166 = vmatmul.mubr.bf16.gmra.mrb[0].mxu0 %v629
    %v2167 = vpop.f32.mrb[0].mxu0
    %v2168 = vadd.f32 %v1753, %v2167
    %v2169 = vpop.f32.mrb[0].mxu0
    %v2170 = vpop.f32.mrb[0].mxu0
    %v2171 = vadd.f32 %v1753, %v2170
    %v2172 = vpop.f32.mrb[0].mxu0
    %2173 = vmatprep.mubr.bf16.mxu0 0
    %2174 = vmatmul.mubr.bf16.gmra.mrb[0].mxu0 %v632
    %v2175 = vpop.f32.mrb[0].mxu0
    %v2176 = vadd.f32 %v1753, %v2175
    %v2177 = vpop.f32.mrb[0].mxu0
    %v2178 = vpop.f32.mrb[0].mxu0
    %v2179 = vadd.f32 %v1753, %v2178
    %v2180 = vpop.f32.mrb[0].mxu0
    %2181 = vmatprep.mubr.bf16.mxu0 0
    %2182 = vmatmul.mubr.bf16.gmra.mrb[0].mxu0 %v635
    %v2183 = vpop.f32.mrb[0].mxu0
    %v2184 = vadd.f32 %v1753, %v2183
    %v2185 = vpop.f32.mrb[0].mxu0
    %v2186 = vpop.f32.mrb[0].mxu0
    %v2187 = vadd.f32 %v1753, %v2186
    %v2188 = vpop.f32.mrb[0].mxu0
    %2189 = vmatprep.mubr.bf16.mxu0 0
    %2190 = vmatmul.mubr.bf16.gmra.mrb[0].mxu0 %v638
    %v2191 = vpop.f32.mrb[0].mxu0
    %v2192 = vadd.f32 %v1753, %v2191
    %v2193 = vpop.f32.mrb[0].mxu0
    %v2194 = vpop.f32.mrb[0].mxu0
    %v2195 = vadd.f32 %v1753, %v2194
    %v2196 = vpop.f32.mrb[0].mxu0
    %2197 = vmatprep.mubr.bf16.mxu0 0
    %2198 = vmatmul.mubr.bf16.gmra.mrb[0].mxu0 %v641
    %v2199 = vpop.f32.mrb[0].mxu0
    %v2200 = vadd.f32 %v1753, %v2199
    %v2201 = vpop.f32.mrb[0].mxu0
    %v2202 = vpop.f32.mrb[0].mxu0
    %v2203 = vadd.f32 %v1753, %v2202
    %v2204 = vpop.f32.mrb[0].mxu0
    %2205 = vmatprep.mubr.bf16.mxu0 0
    %2206 = vmatmul.mubr.bf16.gmra.mrb[0].mxu0 %v644
    %v2207 = vpop.f32.mrb[0].mxu0
    %v2208 = vadd.f32 %v1753, %v2207
    %v2209 = vpop.f32.mrb[0].mxu0
    %v2210 = vpop.f32.mrb[0].mxu0
    %v2211 = vadd.f32 %v1753, %v2210
    %v2212 = vpop.f32.mrb[0].mxu0
    %2213 = vmatprep.mubr.bf16.mxu0 0
    %2214 = vmatmul.mubr.bf16.gmra.mrb[0].mxu0 %v647
    %v2215 = vpop.f32.mrb[0].mxu0
    %v2216 = vadd.f32 %v1753, %v2215
    %v2217 = vpop.f32.mrb[0].mxu0
    %v2218 = vpop.f32.mrb[0].mxu0
    %v2219 = vadd.f32 %v1753, %v2218
    %v2220 = vpop.f32.mrb[0].mxu0
    %2221 = vmatprep.mubr.bf16.mxu0 0
    %2222 = vmatmul.mubr.bf16.gmra.mrb[0].mxu0 %v650
    %v2223 = vpop.f32.mrb[0].mxu0
    %v2224 = vadd.f32 %v1753, %v2223
    %v2225 = vpop.f32.mrb[0].mxu0
    %v2226 = vpop.f32.mrb[0].mxu0
    %v2227 = vadd.f32 %v1753, %v2226
    %v2228 = vpop.f32.mrb[0].mxu0
    %2229 = vmatprep.mubr.bf16.mxu0 0
    %2230 = vmatmul.mubr.bf16.gmra.mrb[0].mxu0 %v653
    %v2231 = vpop.f32.mrb[0].mxu0
    %v2232 = vadd.f32 %v1753, %v2231
    %v2233 = vpop.f32.mrb[0].mxu0
    %v2234 = vpop.f32.mrb[0].mxu0
    %v2235 = vadd.f32 %v1753, %v2234
    %v2236 = vpop.f32.mrb[0].mxu0
    %2237 = vmatprep.mubr.bf16.mxu0 0
    %2238 = vmatmul.mubr.bf16.gmra.mrb[0].mxu0 %v656
    %v2239 = vpop.f32.mrb[0].mxu0
    %v2240 = vadd.f32 %v1753, %v2239
    %v2241 = vpop.f32.mrb[0].mxu0
    %v2242 = vpop.f32.mrb[0].mxu0
    %v2243 = vadd.f32 %v1753, %v2242
    %v2244 = vpop.f32.mrb[0].mxu0
    %2245 = vdwg.mxu0
    %v2246 = vxor.u32 %v1873, 2147483648
    %v2247 = vxor.u32 %v1877, 2147483648
    %v2248 = vxor.u32 %v1883, 2147483648
    %v2249 = vxor.u32 %v1887, 2147483648
    %v2250 = vxor.u32 %v1893, 2147483648
    %v2251 = vxor.u32 %v1897, 2147483648
    %v2252 = vxor.u32 %v1903, 2147483648
    %v2253 = vxor.u32 %v1907, 2147483648
    %v2254 = vxor.u32 %v1913, 2147483648
    %v2255 = vxor.u32 %v1917, 2147483648
    %v2256 = vxor.u32 %v1923, 2147483648
    %v2257 = vxor.u32 %v1927, 2147483648
    %v2258 = vxor.u32 %v1933, 2147483648
    %v2259 = vxor.u32 %v1937, 2147483648
    %v2260 = vxor.u32 %v1943, 2147483648
    %v2261 = vxor.u32 %v1947, 2147483648
    %v2262 = vxor.u32 %v1953, 2147483648
    %v2263 = vxor.u32 %v1957, 2147483648
    %v2264 = vxor.u32 %v1963, 2147483648
    %v2265 = vxor.u32 %v1967, 2147483648
    %v2266 = vxor.u32 %v1973, 2147483648
    %v2267 = vxor.u32 %v1977, 2147483648
    %v2268 = vxor.u32 %v1983, 2147483648
    %v2269 = vxor.u32 %v1987, 2147483648
    %v2270 = vxor.u32 %v1993, 2147483648
    %v2271 = vxor.u32 %v1997, 2147483648
    %v2272 = vxor.u32 %v2003, 2147483648
    %v2273 = vxor.u32 %v2007, 2147483648
    %v2274 = vxor.u32 %v2013, 2147483648
    %v2275 = vxor.u32 %v2017, 2147483648
    %v2276 = vxor.u32 %v2023, 2147483648
    %v2277 = vxor.u32 %v2027, 2147483648
    %v2278 = vxor.u32 %v2033, 2147483648
    %v2279 = vxor.u32 %v2037, 2147483648
    %v2280 = vxor.u32 %v2043, 2147483648
    %v2281 = vxor.u32 %v2047, 2147483648
    %v2282 = vxor.u32 %v2053, 2147483648
    %v2283 = vxor.u32 %v2057, 2147483648
    %v2284 = vmul.f32 %v2246, 1.442695
    %v2285 = vpow.pop %v2284
    %v2286 = vmul.f32 %v2247, 1.442695
    %v2287 = vpow.pop %v2286
    %v2288 = vmul.f32 %v2248, 1.442695
    %v2289 = vpow.pop %v2288
    %v2290 = vmul.f32 %v2249, 1.442695
    %v2291 = vpow.pop %v2290
    %v2292 = vmul.f32 %v2250, 1.442695
    %v2293 = vpow.pop %v2292
    %v2294 = vmul.f32 %v2251, 1.442695
    %v2295 = vpow.pop %v2294
    %v2296 = vmul.f32 %v2252, 1.442695
    %v2297 = vpow.pop %v2296
    %v2298 = vmul.f32 %v2253, 1.442695
    %v2299 = vpow.pop %v2298
    %v2300 = vmul.f32 %v2254, 1.442695
    %v2301 = vpow.pop %v2300
    %v2302 = vmul.f32 %v2255, 1.442695
    %v2303 = vpow.pop %v2302
    %v2304 = vmul.f32 %v2256, 1.442695
    %v2305 = vpow.pop %v2304
    %v2306 = vmul.f32 %v2257, 1.442695
    %v2307 = vpow.pop %v2306
    %v2308 = vmul.f32 %v2258, 1.442695
    %v2309 = vpow.pop %v2308
    %v2310 = vmul.f32 %v2259, 1.442695
    %v2311 = vpow.pop %v2310
    %v2312 = vmul.f32 %v2260, 1.442695
    %v2313 = vpow.pop %v2312
    %v2314 = vmul.f32 %v2261, 1.442695
    %v2315 = vpow.pop %v2314
    %v2316 = vmul.f32 %v2262, 1.442695
    %v2317 = vpow.pop %v2316
    %v2318 = vmul.f32 %v2263, 1.442695
    %v2319 = vpow.pop %v2318
    %v2320 = vmul.f32 %v2264, 1.442695
    %v2321 = vpow.pop %v2320
    %v2322 = vmul.f32 %v2265, 1.442695
    %v2323 = vpow.pop %v2322
    %v2324 = vmul.f32 %v2266, 1.442695
    %v2325 = vpow.pop %v2324
    %v2326 = vmul.f32 %v2267, 1.442695
    %v2327 = vpow.pop %v2326
    %v2328 = vmul.f32 %v2268, 1.442695
    %v2329 = vpow.pop %v2328
    %v2330 = vmul.f32 %v2269, 1.442695
    %v2331 = vpow.pop %v2330
    %v2332 = vmul.f32 %v2270, 1.442695
    %v2333 = vpow.pop %v2332
    %v2334 = vmul.f32 %v2271, 1.442695
    %v2335 = vpow.pop %v2334
    %v2336 = vmul.f32 %v2272, 1.442695
    %v2337 = vpow.pop %v2336
    %v2338 = vmul.f32 %v2273, 1.442695
    %v2339 = vpow.pop %v2338
    %v2340 = vmul.f32 %v2274, 1.442695
    %v2341 = vpow.pop %v2340
    %v2342 = vmul.f32 %v2275, 1.442695
    %v2343 = vpow.pop %v2342
    %v2344 = vmul.f32 %v2276, 1.442695
    %v2345 = vpow.pop %v2344
    %v2346 = vmul.f32 %v2277, 1.442695
    %v2347 = vpow.pop %v2346
    %v2348 = vmul.f32 %v2278, 1.442695
    %v2349 = vpow.pop %v2348
    %v2350 = vmul.f32 %v2279, 1.442695
    %v2351 = vpow.pop %v2350
    %v2352 = vmul.f32 %v2280, 1.442695
    %v2353 = vpow.pop %v2352
    %v2354 = vmul.f32 %v2281, 1.442695
    %v2355 = vpow.pop %v2354
    %v2356 = vmul.f32 %v2282, 1.442695
    %v2357 = vpow.pop %v2356
    %v2358 = vmul.f32 %v2283, 1.442695
    %v2359 = vpow.pop %v2358
    %v2360 = vadd.f32 %v2285, 1.0
    %v2361 = vadd.f32 %v2287, 1.0
    %v2362 = vadd.f32 %v2289, 1.0
    %v2363 = vadd.f32 %v2291, 1.0
    %v2364 = vadd.f32 %v2293, 1.0
    %v2365 = vadd.f32 %v2295, 1.0
    %v2366 = vadd.f32 %v2297, 1.0
    %v2367 = vadd.f32 %v2299, 1.0
    %v2368 = vadd.f32 %v2301, 1.0
    %v2369 = vadd.f32 %v2303, 1.0
    %v2370 = vadd.f32 %v2305, 1.0
    %v2371 = vadd.f32 %v2307, 1.0
    %v2372 = vadd.f32 %v2309, 1.0
    %v2373 = vadd.f32 %v2311, 1.0
    %v2374 = vadd.f32 %v2313, 1.0
    %v2375 = vadd.f32 %v2315, 1.0
    %v2376 = vadd.f32 %v2317, 1.0
    %v2377 = vadd.f32 %v2319, 1.0
    %v2378 = vadd.f32 %v2321, 1.0
    %v2379 = vadd.f32 %v2323, 1.0
    %v2380 = vadd.f32 %v2325, 1.0
    %v2381 = vadd.f32 %v2327, 1.0
    %v2382 = vadd.f32 %v2329, 1.0
    %v2383 = vadd.f32 %v2331, 1.0
    %v2384 = vadd.f32 %v2333, 1.0
    %v2385 = vadd.f32 %v2335, 1.0
    %v2386 = vadd.f32 %v2337, 1.0
    %v2387 = vadd.f32 %v2339, 1.0
    %v2388 = vadd.f32 %v2341, 1.0
    %v2389 = vadd.f32 %v2343, 1.0
    %v2390 = vadd.f32 %v2345, 1.0
    %v2391 = vadd.f32 %v2347, 1.0
    %v2392 = vadd.f32 %v2349, 1.0
    %v2393 = vadd.f32 %v2351, 1.0
    %v2394 = vadd.f32 %v2353, 1.0
    %v2395 = vadd.f32 %v2355, 1.0
    %v2396 = vadd.f32 %v2357, 1.0
    %v2397 = vadd.f32 %v2359, 1.0
    %v2398 = vrcp.pop %v2360
    %v2399 = vmul.f32 1.0, %v2398
    %v2400 = vrcp.pop %v2361
    %v2401 = vmul.f32 1.0, %v2400
    %v2402 = vrcp.pop %v2362
    %v2403 = vmul.f32 1.0, %v2402
    %v2404 = vrcp.pop %v2363
    %v2405 = vmul.f32 1.0, %v2404
    %v2406 = vrcp.pop %v2364
    %v2407 = vmul.f32 1.0, %v2406
    %v2408 = vrcp.pop %v2365
    %v2409 = vmul.f32 1.0, %v2408
    %v2410 = vrcp.pop %v2366
    %v2411 = vmul.f32 1.0, %v2410
    %v2412 = vrcp.pop %v2367
    %v2413 = vmul.f32 1.0, %v2412
    %v2414 = vrcp.pop %v2368
    %v2415 = vmul.f32 1.0, %v2414
    %v2416 = vrcp.pop %v2369
    %v2417 = vmul.f32 1.0, %v2416
    %v2418 = vrcp.pop %v2370
    %v2419 = vmul.f32 1.0, %v2418
    %v2420 = vrcp.pop %v2371
    %v2421 = vmul.f32 1.0, %v2420
    %v2422 = vrcp.pop %v2372
    %v2423 = vmul.f32 1.0, %v2422
    %v2424 = vrcp.pop %v2373
    %v2425 = vmul.f32 1.0, %v2424
    %v2426 = vrcp.pop %v2374
    %v2427 = vmul.f32 1.0, %v2426
    %v2428 = vrcp.pop %v2375
    %v2429 = vmul.f32 1.0, %v2428
    %v2430 = vrcp.pop %v2376
    %v2431 = vmul.f32 1.0, %v2430
    %v2432 = vrcp.pop %v2377
    %v2433 = vmul.f32 1.0, %v2432
    %v2434 = vrcp.pop %v2378
    %v2435 = vmul.f32 1.0, %v2434
    %v2436 = vrcp.pop %v2379
    %v2437 = vmul.f32 1.0, %v2436
    %v2438 = vrcp.pop %v2380
    %v2439 = vmul.f32 1.0, %v2438
    %v2440 = vrcp.pop %v2381
    %v2441 = vmul.f32 1.0, %v2440
    %v2442 = vrcp.pop %v2382
    %v2443 = vmul.f32 1.0, %v2442
    %v2444 = vrcp.pop %v2383
    %v2445 = vmul.f32 1.0, %v2444
    %v2446 = vrcp.pop %v2384
    %v2447 = vmul.f32 1.0, %v2446
    %v2448 = vrcp.pop %v2385
    %v2449 = vmul.f32 1.0, %v2448
    %v2450 = vrcp.pop %v2386
    %v2451 = vmul.f32 1.0, %v2450
    %v2452 = vrcp.pop %v2387
    %v2453 = vmul.f32 1.0, %v2452
    %v2454 = vrcp.pop %v2388
    %v2455 = vmul.f32 1.0, %v2454
    %v2456 = vrcp.pop %v2389
    %v2457 = vmul.f32 1.0, %v2456
    %v2458 = vrcp.pop %v2390
    %v2459 = vmul.f32 1.0, %v2458
    %v2460 = vrcp.pop %v2391
    %v2461 = vmul.f32 1.0, %v2460
    %v2462 = vrcp.pop %v2392
    %v2463 = vmul.f32 1.0, %v2462
    %v2464 = vrcp.pop %v2393
    %v2465 = vmul.f32 1.0, %v2464
    %v2466 = vrcp.pop %v2394
    %v2467 = vmul.f32 1.0, %v2466
    %v2468 = vrcp.pop %v2395
    %v2469 = vmul.f32 1.0, %v2468
    %v2470 = vrcp.pop %v2396
    %v2471 = vmul.f32 1.0, %v2470
    %v2472 = vrcp.pop %v2397
    %v2473 = vmul.f32 1.0, %v2472
    %v2474 = vtanh.pop %v1875
    %v2475 = vtanh.pop %v1879
    %v2476 = vtanh.pop %v1885
    %v2477 = vtanh.pop %v1889
    %v2478 = vtanh.pop %v1895
    %v2479 = vtanh.pop %v1899
    %v2480 = vtanh.pop %v1905
    %v2481 = vtanh.pop %v1909
    %v2482 = vtanh.pop %v1915
    %v2483 = vtanh.pop %v1919
    %v2484 = vtanh.pop %v1925
    %v2485 = vtanh.pop %v1929
    %v2486 = vtanh.pop %v1935
    %v2487 = vtanh.pop %v1939
    %v2488 = vtanh.pop %v1945
    %v2489 = vtanh.pop %v1949
    %v2490 = vtanh.pop %v1955
    %v2491 = vtanh.pop %v1959
    %v2492 = vtanh.pop %v1965
    %v2493 = vtanh.pop %v1969
    %v2494 = vtanh.pop %v1975
    %v2495 = vtanh.pop %v1979
    %v2496 = vtanh.pop %v1985
    %v2497 = vtanh.pop %v1989
    %v2498 = vtanh.pop %v1995
    %v2499 = vtanh.pop %v1999
    %v2500 = vtanh.pop %v2005
    %v2501 = vtanh.pop %v2009
    %v2502 = vtanh.pop %v2015
    %v2503 = vtanh.pop %v2019
    %v2504 = vtanh.pop %v2025
    %v2505 = vtanh.pop %v2029
    %v2506 = vtanh.pop %v2035
    %v2507 = vtanh.pop %v2039
    %v2508 = vtanh.pop %v2045
    %v2509 = vtanh.pop %v2049
    %v2510 = vtanh.pop %v2055
    %v2511 = vtanh.pop %v2059
    %v2512 = vxor.u32 %v2096, 2147483648
    %v2513 = vxor.u32 %v2099, 2147483648
    %v2514 = vxor.u32 %v2104, 2147483648
    %v2515 = vxor.u32 %v2107, 2147483648
    %v2516 = vxor.u32 %v2112, 2147483648
    %v2517 = vxor.u32 %v2115, 2147483648
    %v2518 = vxor.u32 %v2120, 2147483648
    %v2519 = vxor.u32 %v2123, 2147483648
    %v2520 = vxor.u32 %v2128, 2147483648
    %v2521 = vxor.u32 %v2131, 2147483648
    %v2522 = vxor.u32 %v2136, 2147483648
    %v2523 = vxor.u32 %v2139, 2147483648
    %v2524 = vxor.u32 %v2144, 2147483648
    %v2525 = vxor.u32 %v2147, 2147483648
    %v2526 = vxor.u32 %v2152, 2147483648
    %v2527 = vxor.u32 %v2155, 2147483648
    %v2528 = vxor.u32 %v2160, 2147483648
    %v2529 = vxor.u32 %v2163, 2147483648
    %v2530 = vxor.u32 %v2168, 2147483648
    %v2531 = vxor.u32 %v2171, 2147483648
    %v2532 = vxor.u32 %v2176, 2147483648
    %v2533 = vxor.u32 %v2179, 2147483648
    %v2534 = vxor.u32 %v2184, 2147483648
    %v2535 = vxor.u32 %v2187, 2147483648
    %v2536 = vxor.u32 %v2192, 2147483648
    %v2537 = vxor.u32 %v2195, 2147483648
    %v2538 = vxor.u32 %v2200, 2147483648
    %v2539 = vxor.u32 %v2203, 2147483648
    %v2540 = vxor.u32 %v2208, 2147483648
    %v2541 = vxor.u32 %v2211, 2147483648
    %v2542 = vxor.u32 %v2216, 2147483648
    %v2543 = vxor.u32 %v2219, 2147483648
    %v2544 = vxor.u32 %v2224, 2147483648
    %v2545 = vxor.u32 %v2227, 2147483648
    %v2546 = vxor.u32 %v2232, 2147483648
    %v2547 = vxor.u32 %v2235, 2147483648
    %v2548 = vxor.u32 %v2240, 2147483648
    %v2549 = vxor.u32 %v2243, 2147483648
    %v2550 = vmul.f32 %v2512, 1.442695
    %v2551 = vpow.pop %v2550
    %v2552 = vmul.f32 %v2513, 1.442695
    %v2553 = vpow.pop %v2552
    %v2554 = vmul.f32 %v2514, 1.442695
    %v2555 = vpow.pop %v2554
    %v2556 = vmul.f32 %v2515, 1.442695
    %v2557 = vpow.pop %v2556
    %v2558 = vmul.f32 %v2516, 1.442695
    %v2559 = vpow.pop %v2558
    %v2560 = vmul.f32 %v2517, 1.442695
    %v2561 = vpow.pop %v2560
    %v2562 = vmul.f32 %v2518, 1.442695
    %v2563 = vpow.pop %v2562
    %v2564 = vmul.f32 %v2519, 1.442695
    %v2565 = vpow.pop %v2564
    %v2566 = vmul.f32 %v2520, 1.442695
    %v2567 = vpow.pop %v2566
    %v2568 = vmul.f32 %v2521, 1.442695
    %v2569 = vpow.pop %v2568
    %v2570 = vmul.f32 %v2522, 1.442695
    %v2571 = vpow.pop %v2570
    %v2572 = vmul.f32 %v2523, 1.442695
    %v2573 = vpow.pop %v2572
    %v2574 = vmul.f32 %v2524, 1.442695
    %v2575 = vpow.pop %v2574
    %v2576 = vmul.f32 %v2525, 1.442695
    %v2577 = vpow.pop %v2576
    %v2578 = vmul.f32 %v2526, 1.442695
    %v2579 = vpow.pop %v2578
    %v2580 = vmul.f32 %v2527, 1.442695
    %v2581 = vpow.pop %v2580
    %v2582 = vmul.f32 %v2528, 1.442695
    %v2583 = vpow.pop %v2582
    %v2584 = vmul.f32 %v2529, 1.442695
    %v2585 = vpow.pop %v2584
    %v2586 = vmul.f32 %v2530, 1.442695
    %v2587 = vpow.pop %v2586
    %v2588 = vmul.f32 %v2531, 1.442695
    %v2589 = vpow.pop %v2588
    %v2590 = vmul.f32 %v2532, 1.442695
    %v2591 = vpow.pop %v2590
    %v2592 = vmul.f32 %v2533, 1.442695
    %v2593 = vpow.pop %v2592
    %v2594 = vmul.f32 %v2534, 1.442695
    %v2595 = vpow.pop %v2594
    %v2596 = vmul.f32 %v2535, 1.442695
    %v2597 = vpow.pop %v2596
    %v2598 = vmul.f32 %v2536, 1.442695
    %v2599 = vpow.pop %v2598
    %v2600 = vmul.f32 %v2537, 1.442695
    %v2601 = vpow.pop %v2600
    %v2602 = vmul.f32 %v2538, 1.442695
    %v2603 = vpow.pop %v2602
    %v2604 = vmul.f32 %v2539, 1.442695
    %v2605 = vpow.pop %v2604
    %v2606 = vmul.f32 %v2540, 1.442695
    %v2607 = vpow.pop %v2606
    %v2608 = vmul.f32 %v2541, 1.442695
    %v2609 = vpow.pop %v2608
    %v2610 = vmul.f32 %v2542, 1.442695
    %v2611 = vpow.pop %v2610
    %v2612 = vmul.f32 %v2543, 1.442695
    %v2613 = vpow.pop %v2612
    %v2614 = vmul.f32 %v2544, 1.442695
    %v2615 = vpow.pop %v2614
    %v2616 = vmul.f32 %v2545, 1.442695
    %v2617 = vpow.pop %v2616
    %v2618 = vmul.f32 %v2546, 1.442695
    %v2619 = vpow.pop %v2618
    %v2620 = vmul.f32 %v2547, 1.442695
    %v2621 = vpow.pop %v2620
    %v2622 = vmul.f32 %v2548, 1.442695
    %v2623 = vpow.pop %v2622
    %v2624 = vmul.f32 %v2549, 1.442695
    %v2625 = vpow.pop %v2624
    %v2626 = vadd.f32 %v2551, 1.0
    %v2627 = vadd.f32 %v2553, 1.0
    %v2628 = vadd.f32 %v2555, 1.0
    %v2629 = vadd.f32 %v2557, 1.0
    %v2630 = vadd.f32 %v2559, 1.0
    %v2631 = vadd.f32 %v2561, 1.0
    %v2632 = vadd.f32 %v2563, 1.0
    %v2633 = vadd.f32 %v2565, 1.0
    %v2634 = vadd.f32 %v2567, 1.0
    %v2635 = vadd.f32 %v2569, 1.0
    %v2636 = vadd.f32 %v2571, 1.0
    %v2637 = vadd.f32 %v2573, 1.0
    %v2638 = vadd.f32 %v2575, 1.0
    %v2639 = vadd.f32 %v2577, 1.0
    %v2640 = vadd.f32 %v2579, 1.0
    %v2641 = vadd.f32 %v2581, 1.0
    %v2642 = vadd.f32 %v2583, 1.0
    %v2643 = vadd.f32 %v2585, 1.0
    %v2644 = vadd.f32 %v2587, 1.0
    %v2645 = vadd.f32 %v2589, 1.0
    %v2646 = vadd.f32 %v2591, 1.0
    %v2647 = vadd.f32 %v2593, 1.0
    %v2648 = vadd.f32 %v2595, 1.0
    %v2649 = vadd.f32 %v2597, 1.0
    %v2650 = vadd.f32 %v2599, 1.0
    %v2651 = vadd.f32 %v2601, 1.0
    %v2652 = vadd.f32 %v2603, 1.0
    %v2653 = vadd.f32 %v2605, 1.0
    %v2654 = vadd.f32 %v2607, 1.0
    %v2655 = vadd.f32 %v2609, 1.0
    %v2656 = vadd.f32 %v2611, 1.0
    %v2657 = vadd.f32 %v2613, 1.0
    %v2658 = vadd.f32 %v2615, 1.0
    %v2659 = vadd.f32 %v2617, 1.0
    %v2660 = vadd.f32 %v2619, 1.0
    %v2661 = vadd.f32 %v2621, 1.0
    %v2662 = vadd.f32 %v2623, 1.0
    %v2663 = vadd.f32 %v2625, 1.0
    %v2664 = vrcp.pop %v2626
    %v2665 = vmul.f32 1.0, %v2664
    %v2666 = vrcp.pop %v2627
    %v2667 = vmul.f32 1.0, %v2666
    %v2668 = vrcp.pop %v2628
    %v2669 = vmul.f32 1.0, %v2668
    %v2670 = vrcp.pop %v2629
    %v2671 = vmul.f32 1.0, %v2670
    %v2672 = vrcp.pop %v2630
    %v2673 = vmul.f32 1.0, %v2672
    %v2674 = vrcp.pop %v2631
    %v2675 = vmul.f32 1.0, %v2674
    %v2676 = vrcp.pop %v2632
    %v2677 = vmul.f32 1.0, %v2676
    %v2678 = vrcp.pop %v2633
    %v2679 = vmul.f32 1.0, %v2678
    %v2680 = vrcp.pop %v2634
    %v2681 = vmul.f32 1.0, %v2680
    %v2682 = vrcp.pop %v2635
    %v2683 = vmul.f32 1.0, %v2682
    %v2684 = vrcp.pop %v2636
    %v2685 = vmul.f32 1.0, %v2684
    %v2686 = vrcp.pop %v2637
    %v2687 = vmul.f32 1.0, %v2686
    %v2688 = vrcp.pop %v2638
    %v2689 = vmul.f32 1.0, %v2688
    %v2690 = vrcp.pop %v2639
    %v2691 = vmul.f32 1.0, %v2690
    %v2692 = vrcp.pop %v2640
    %v2693 = vmul.f32 1.0, %v2692
    %v2694 = vrcp.pop %v2641
    %v2695 = vmul.f32 1.0, %v2694
    %v2696 = vrcp.pop %v2642
    %v2697 = vmul.f32 1.0, %v2696
    %v2698 = vrcp.pop %v2643
    %v2699 = vmul.f32 1.0, %v2698
    %v2700 = vrcp.pop %v2644
    %v2701 = vmul.f32 1.0, %v2700
    %v2702 = vrcp.pop %v2645
    %v2703 = vmul.f32 1.0, %v2702
    %v2704 = vrcp.pop %v2646
    %v2705 = vmul.f32 1.0, %v2704
    %v2706 = vrcp.pop %v2647
    %v2707 = vmul.f32 1.0, %v2706
    %v2708 = vrcp.pop %v2648
    %v2709 = vmul.f32 1.0, %v2708
    %v2710 = vrcp.pop %v2649
    %v2711 = vmul.f32 1.0, %v2710
    %v2712 = vrcp.pop %v2650
    %v2713 = vmul.f32 1.0, %v2712
    %v2714 = vrcp.pop %v2651
    %v2715 = vmul.f32 1.0, %v2714
    %v2716 = vrcp.pop %v2652
    %v2717 = vmul.f32 1.0, %v2716
    %v2718 = vrcp.pop %v2653
    %v2719 = vmul.f32 1.0, %v2718
    %v2720 = vrcp.pop %v2654
    %v2721 = vmul.f32 1.0, %v2720
    %v2722 = vrcp.pop %v2655
    %v2723 = vmul.f32 1.0, %v2722
    %v2724 = vrcp.pop %v2656
    %v2725 = vmul.f32 1.0, %v2724
    %v2726 = vrcp.pop %v2657
    %v2727 = vmul.f32 1.0, %v2726
    %v2728 = vrcp.pop %v2658
    %v2729 = vmul.f32 1.0, %v2728
    %v2730 = vrcp.pop %v2659
    %v2731 = vmul.f32 1.0, %v2730
    %v2732 = vrcp.pop %v2660
    %v2733 = vmul.f32 1.0, %v2732
    %v2734 = vrcp.pop %v2661
    %v2735 = vmul.f32 1.0, %v2734
    %v2736 = vrcp.pop %v2662
    %v2737 = vmul.f32 1.0, %v2736
    %v2738 = vrcp.pop %v2663
    %v2739 = vmul.f32 1.0, %v2738
    %v2740 = vmul.f32 %v2399, %v2474
    %v2741 = vmul.f32 %v2401, %v2475
    %v2742 = vmul.f32 %v2403, %v2476
    %v2743 = vmul.f32 %v2405, %v2477
    %v2744 = vmul.f32 %v2407, %v2478
    %v2745 = vmul.f32 %v2409, %v2479
    %v2746 = vmul.f32 %v2411, %v2480
    %v2747 = vmul.f32 %v2413, %v2481
    %v2748 = vmul.f32 %v2415, %v2482
    %v2749 = vmul.f32 %v2417, %v2483
    %v2750 = vmul.f32 %v2419, %v2484
    %v2751 = vmul.f32 %v2421, %v2485
    %v2752 = vmul.f32 %v2423, %v2486
    %v2753 = vmul.f32 %v2425, %v2487
    %v2754 = vmul.f32 %v2427, %v2488
    %v2755 = vmul.f32 %v2429, %v2489
    %v2756 = vmul.f32 %v2431, %v2490
    %v2757 = vmul.f32 %v2433, %v2491
    %v2758 = vmul.f32 %v2435, %v2492
    %v2759 = vmul.f32 %v2437, %v2493
    %v2760 = vmul.f32 %v2439, %v2494
    %v2761 = vmul.f32 %v2441, %v2495
    %v2762 = vmul.f32 %v2443, %v2496
    %v2763 = vmul.f32 %v2445, %v2497
    %v2764 = vmul.f32 %v2447, %v2498
    %v2765 = vmul.f32 %v2449, %v2499
    %v2766 = vmul.f32 %v2451, %v2500
    %v2767 = vmul.f32 %v2453, %v2501
    %v2768 = vmul.f32 %v2455, %v2502
    %v2769 = vmul.f32 %v2457, %v2503
    %v2770 = vmul.f32 %v2459, %v2504
    %v2771 = vmul.f32 %v2461, %v2505
    %v2772 = vmul.f32 %v2463, %v2506
    %v2773 = vmul.f32 %v2465, %v2507
    %v2774 = vmul.f32 %v2467, %v2508
    %v2775 = vmul.f32 %v2469, %v2509
    %v2776 = vmul.f32 %v2471, %v2510
    %v2777 = vmul.f32 %v2473, %v2511
    %v2778 = vtanh.pop %v2740
    %v2779 = vtanh.pop %v2741
    %v2780 = vtanh.pop %v2742
    %v2781 = vtanh.pop %v2743
    %v2782 = vtanh.pop %v2744
    %v2783 = vtanh.pop %v2745
    %v2784 = vtanh.pop %v2746
    %v2785 = vtanh.pop %v2747
    %v2786 = vtanh.pop %v2748
    %v2787 = vtanh.pop %v2749
    %v2788 = vtanh.pop %v2750
    %v2789 = vtanh.pop %v2751
    %v2790 = vtanh.pop %v2752
    %v2791 = vtanh.pop %v2753
    %v2792 = vtanh.pop %v2754
    %v2793 = vtanh.pop %v2755
    %v2794 = vtanh.pop %v2756
    %v2795 = vtanh.pop %v2757
    %v2796 = vtanh.pop %v2758
    %v2797 = vtanh.pop %v2759
    %v2798 = vtanh.pop %v2760
    %v2799 = vtanh.pop %v2761
    %v2800 = vtanh.pop %v2762
    %v2801 = vtanh.pop %v2763
    %v2802 = vtanh.pop %v2764
    %v2803 = vtanh.pop %v2765
    %v2804 = vtanh.pop %v2766
    %v2805 = vtanh.pop %v2767
    %v2806 = vtanh.pop %v2768
    %v2807 = vtanh.pop %v2769
    %v2808 = vtanh.pop %v2770
    %v2809 = vtanh.pop %v2771
    %v2810 = vtanh.pop %v2772
    %v2811 = vtanh.pop %v2773
    %v2812 = vtanh.pop %v2774
    %v2813 = vtanh.pop %v2775
    %v2814 = vtanh.pop %v2776
    %v2815 = vtanh.pop %v2777
    %v2816 = vmul.f32 %v2665, %v2778
    %v2817 = vmul.f32 %v2667, %v2779
    %v2818 = vmul.f32 %v2669, %v2780
    %v2819 = vmul.f32 %v2671, %v2781
    %v2820 = vmul.f32 %v2673, %v2782
    %v2821 = vmul.f32 %v2675, %v2783
    %v2822 = vmul.f32 %v2677, %v2784
    %v2823 = vmul.f32 %v2679, %v2785
    %v2824 = vmul.f32 %v2681, %v2786
    %v2825 = vmul.f32 %v2683, %v2787
    %v2826 = vmul.f32 %v2685, %v2788
    %v2827 = vmul.f32 %v2687, %v2789
    %v2828 = vmul.f32 %v2689, %v2790
    %v2829 = vmul.f32 %v2691, %v2791
    %v2830 = vmul.f32 %v2693, %v2792
    %v2831 = vmul.f32 %v2695, %v2793
    %v2832 = vmul.f32 %v2697, %v2794
    %v2833 = vmul.f32 %v2699, %v2795
    %v2834 = vmul.f32 %v2701, %v2796
    %v2835 = vmul.f32 %v2703, %v2797
    %v2836 = vmul.f32 %v2705, %v2798
    %v2837 = vmul.f32 %v2707, %v2799
    %v2838 = vmul.f32 %v2709, %v2800
    %v2839 = vmul.f32 %v2711, %v2801
    %v2840 = vmul.f32 %v2713, %v2802
    %v2841 = vmul.f32 %v2715, %v2803
    %v2842 = vmul.f32 %v2717, %v2804
    %v2843 = vmul.f32 %v2719, %v2805
    %v2844 = vmul.f32 %v2721, %v2806
    %v2845 = vmul.f32 %v2723, %v2807
    %v2846 = vmul.f32 %v2725, %v2808
    %v2847 = vmul.f32 %v2727, %v2809
    %v2848 = vmul.f32 %v2729, %v2810
    %v2849 = vmul.f32 %v2731, %v2811
    %v2850 = vmul.f32 %v2733, %v2812
    %v2851 = vmul.f32 %v2735, %v2813
    %v2852 = vmul.f32 %v2737, %v2814
    %v2853 = vmul.f32 %v2739, %v2815
    %2854 = vst [vmem:[#allocation2 + $0x8] sm:$0xff] %v2816
    %2855 = vst [vmem:[#allocation2 + $0x18] sm:$0xff] %v2817
    %2856 = vst [vmem:[#allocation2 + $0x28] sm:$0xff] %v2818
    %2857 = vst [vmem:[#allocation2 + $0x38] sm:$0xff] %v2819
    %2858 = vst [vmem:[#allocation2 + $0x48] sm:$0xff] %v2820
    %2859 = vst [vmem:[#allocation2 + $0x58] sm:$0xff] %v2821
    %2860 = vst [vmem:[#allocation2 + $0x68] sm:$0xff] %v2822
    %2861 = vst [vmem:[#allocation2 + $0x78] sm:$0xff] %v2823
    %2862 = vst [vmem:[#allocation2 + $0x88] sm:$0xff] %v2824
    %2863 = vst [vmem:[#allocation2 + $0x98] sm:$0xff] %v2825
    %2864 = vst [vmem:[#allocation2 + $0xa8] sm:$0xff] %v2826
    %2865 = vst [vmem:[#allocation2 + $0xb8] sm:$0xff] %v2827
    %2866 = vst [vmem:[#allocation2 + $0xc8] sm:$0xff] %v2828
    %2867 = vst [vmem:[#allocation2 + $0xd8] sm:$0xff] %v2829
    %2868 = vst [vmem:[#allocation2 + $0xe8] sm:$0xff] %v2830
    %2869 = vst [vmem:[#allocation2 + $0xf8] sm:$0xff] %v2831
    %2870 = vst [vmem:[#allocation2 + $0x108] sm:$0xff] %v2832
    %2871 = vst [vmem:[#allocation2 + $0x118] sm:$0xff] %v2833
    %2872 = vst [vmem:[#allocation2 + $0x128] sm:$0xff] %v2834
    %2873 = vst [vmem:[#allocation2 + $0x138] sm:$0xff] %v2835
    %2874 = vst [vmem:[#allocation2 + $0x148] sm:$0xff] %v2836
    %2875 = vst [vmem:[#allocation2 + $0x158] sm:$0xff] %v2837
    %2876 = vst [vmem:[#allocation2 + $0x168] sm:$0xff] %v2838
    %2877 = vst [vmem:[#allocation2 + $0x178] sm:$0xff] %v2839
    %2878 = vst [vmem:[#allocation2 + $0x188] sm:$0xff] %v2840
    %2879 = vst [vmem:[#allocation2 + $0x198] sm:$0xff] %v2841
    %2880 = vst [vmem:[#allocation2 + $0x1a8] sm:$0xff] %v2842
    %2881 = vst [vmem:[#allocation2 + $0x1b8] sm:$0xff] %v2843
    %2882 = vst [vmem:[#allocation2 + $0x1c8] sm:$0xff] %v2844
    %2883 = vst [vmem:[#allocation2 + $0x1d8] sm:$0xff] %v2845
    %2884 = vst [vmem:[#allocation2 + $0x1e8] sm:$0xff] %v2846
    %2885 = vst [vmem:[#allocation2 + $0x1f8] sm:$0xff] %v2847
    %2886 = vst [vmem:[#allocation2 + $0x208] sm:$0xff] %v2848
    %2887 = vst [vmem:[#allocation2 + $0x218] sm:$0xff] %v2849
    %2888 = vst [vmem:[#allocation2 + $0x228] sm:$0xff] %v2850
    %2889 = vst [vmem:[#allocation2 + $0x238] sm:$0xff] %v2851
    %2890 = vst [vmem:[#allocation2 + $0x248] sm:$0xff] %v2852
    %2891 = vst [vmem:[#allocation2 + $0x258] sm:$0xf] %v2853
    // Predicated region
    $region14: #{tpu_custom_call.1} parent=1 // pred_check
      _
    $region15: #{tpu_custom_call.1} parent=1 // pred_check_branch
      %2893 = sbr.rel (0) target = $region17
    $region16: #{tpu_custom_call.1} parent=1 // pred_region
      %s2895 = ssub.s32 9728, 9728
      %2896 = vsyncadd [#allocation3], %s2895
      %s2897 = sshll.u32 [#allocation2], 4
      %s2898 = int_to_ptr.vmem [resolvable:$true] %s2897
      %2903 = dma.vmem_to_hbm [thread:$0]  %s2898, 9728, %s3, [#allocation3], 256, 256, 16
    $region17: #{tpu_custom_call.1} parent=1 // pred_fallthru
      _
    // Predicated region
    $region18: #{tpu_custom_call.1} parent=1 // pred_check
      _
    $region19: #{tpu_custom_call.1} parent=1 // pred_check_branch
      %2905 = sbr.rel (0) target = $region21
    $region20: #{tpu_custom_call.1} parent=1 // pred_region
      %2906 = dma.done [#allocation3], 9728
    $region21: #{tpu_custom_call.1} parent=1 // pred_fallthru
      _
    %2907 = vsyncpa [#allocation3], 1

</llo_original>
